<compile_context>
chip_gen: v7x
topology: tpu7x:2x2x1
jax: 0.10.0
libtpu: 0.0.40
codegen_flags: <defaults>
</compile_context>

<pallas_src>
import functools

import jax
import jax.numpy as jnp
from jax import lax
from jax.experimental import pallas as pl
from jax.experimental.pallas import tpu as pltpu

N_LAYERS = 4
LAYER_DIMS = [(4, 6), (6, 8), (8, 16), (16, 32)]
C_PAD = 32                # every layer's channel dim zero-padded to 32
BN_EPS = 1e-5
NORM_EPS_SQ = 1e-24       # (1e-12)^2 -> clamp applied to the squared L2 norm


def gcn_fused_kernel(a_ref, x_ref, w_ref, p_ref, o_ref, *, num_nodes):
    """All 4 SAGE layers fused: mean-agg, linear, L2-normalize, ReLU, (BN)."""
    a = a_ref[...]                       # (N, N)  row-normalized adjacency
    h = x_ref[...]                       # (N, 32) zero-padded node features
    inv_n = jnp.float32(1.0 / num_nodes)

    for layer in range(N_LAYERS):        # static unroll: weights are VMEM-resident
        w_l = w_ref[layer, 0]            # (32, 32)  lin_l weight (pre-transposed, padded)
        w_r = w_ref[layer, 1]            # (32, 32)  lin_r weight (pre-transposed, padded)
        p = p_ref[layer]                 # (3, 32)   [b_l; gamma; beta]
        b_l = p[0:1, :]
        gamma = p[1:2, :]
        beta = p[2:3, :]

        # mean neighbor aggregation + SAGE linear part (MXU, f32 accumulation)
        agg = jnp.dot(a, h, preferred_element_type=jnp.float32)            # (N, 32)
        z = (jnp.dot(agg, w_l, preferred_element_type=jnp.float32)
             + jnp.dot(h, w_r, preferred_element_type=jnp.float32)
             + b_l)                                                         # (N, 32)

        # normalize=True -> F.normalize(z, p=2, dim=-1); rsqrt-multiply form
        ssq = jnp.sum(z * z, axis=-1, keepdims=True)
        z = z * lax.rsqrt(jnp.maximum(ssq, NORM_EPS_SQ))

        # ReLU
        z = jnp.maximum(z, 0.0)

        if layer < N_LAYERS - 1:
            # BatchNorm1d (training mode), one-pass stats: E[z], E[z^2]
            mean = jnp.sum(z, axis=0, keepdims=True) * inv_n
            ex2 = jnp.sum(z * z, axis=0, keepdims=True) * inv_n
            var = ex2 - mean * mean
            z = (z - mean) * lax.rsqrt(var + BN_EPS) * gamma + beta

        h = z

    o_ref[...] = h


def gcn_net_fused(a, x_pad, w_stack, p_stack):
    """Single pallas_call for the whole GCNNet forward."""
    n = a.shape[0]
    kernel = functools.partial(gcn_fused_kernel, num_nodes=n)
    return pl.pallas_call(
        kernel,
        out_shape=jax.ShapeDtypeStruct((n, C_PAD), jnp.float32),
        grid=(1,),
        in_specs=[
            pl.BlockSpec((n, n), lambda i: (0, 0)),
            pl.BlockSpec((n, C_PAD), lambda i: (0, 0)),
            pl.BlockSpec((N_LAYERS, 2, C_PAD, C_PAD), lambda i: (0, 0, 0, 0)),
            pl.BlockSpec((N_LAYERS, 3, C_PAD), lambda i: (0, 0, 0)),
        ],
        out_specs=pl.BlockSpec((n, C_PAD), lambda i: (0, 0)),
        compiler_params=pltpu.CompilerParams(
            dimension_semantics=("arbitrary",)),
    )(a, x_pad, w_stack, p_stack)


def edge_index_to_mean_adj(edge_index, num_nodes):
    """Dense row-normalized adjacency for mean aggregation: A[dst, src]."""
    src, dst = edge_index[0], edge_index[1]
    a = jnp.zeros((num_nodes, num_nodes), jnp.float32)
    a = a.at[dst, src].add(1.0)
    deg = jnp.sum(a, axis=1, keepdims=True)
    return a / jnp.maximum(deg, 1.0)


def init_params(key):
    """Deterministic synthetic parameters matching GCNNet's layer shapes."""
    params = []
    for (cin, cout) in LAYER_DIMS:
        key, k1, k2, k3, k4, k5 = jax.random.split(key, 6)
        scale = 1.0 / jnp.sqrt(jnp.float32(cin))
        w_l = jax.random.uniform(k1, (cin, cout), jnp.float32, -scale, scale)
        b_l = jax.random.uniform(k2, (1, cout), jnp.float32, -scale, scale)
        w_r = jax.random.uniform(k3, (cin, cout), jnp.float32, -scale, scale)
        gamma = 1.0 + 0.1 * jax.random.normal(k4, (1, cout), jnp.float32)
        beta = 0.1 * jax.random.normal(k5, (1, cout), jnp.float32)
        params.append(dict(w_l=w_l, b_l=b_l, w_r=w_r, gamma=gamma, beta=beta))
    return params


def pack_params(params):
    """Zero-pad all layers to C_PAD and stack into two dense inputs."""
    w = jnp.zeros((N_LAYERS, 2, C_PAD, C_PAD), jnp.float32)
    p = jnp.zeros((N_LAYERS, 3, C_PAD), jnp.float32)
    for i, (layer, (cin, cout)) in enumerate(zip(params, LAYER_DIMS)):
        w = w.at[i, 0, :cin, :cout].set(layer["w_l"])
        w = w.at[i, 1, :cin, :cout].set(layer["w_r"])
        p = p.at[i, 0, :cout].set(layer["b_l"].reshape(-1))
        if i < N_LAYERS - 1:  # layer 4 has no BatchNorm
            p = p.at[i, 1, :cout].set(layer["gamma"].reshape(-1))
            p = p.at[i, 2, :cout].set(layer["beta"].reshape(-1))
    return w, p


def gcn_net_forward(x, edge_index, params):
    n, cin = x.shape
    a = edge_index_to_mean_adj(edge_index, n)
    x_pad = jnp.zeros((n, C_PAD), jnp.float32).at[:, :cin].set(x)
    w_stack, p_stack = pack_params(params)
    return gcn_net_fused(a, x_pad, w_stack, p_stack)


def gcn_net_reference(x, edge_index, params):
    """Pure-JAX reference mirroring the kernel math (f32, HIGHEST-precision dots)."""
    n = x.shape[0]
    a = edge_index_to_mean_adj(edge_index, n)
    h = x
    for i, layer in enumerate(params):
        agg = jnp.dot(a, h, precision=lax.Precision.HIGHEST)
        z = (jnp.dot(agg, layer["w_l"], precision=lax.Precision.HIGHEST)
             + jnp.dot(h, layer["w_r"], precision=lax.Precision.HIGHEST)
             + layer["b_l"])
        ssq = jnp.sum(z * z, axis=-1, keepdims=True)
        z = z * lax.rsqrt(jnp.maximum(ssq, NORM_EPS_SQ))
        z = jnp.maximum(z, 0.0)
        if i < len(params) - 1:
            mean = jnp.mean(z, axis=0, keepdims=True)
            var = jnp.mean(z * z, axis=0, keepdims=True) - mean * mean
            z = (z - mean) * lax.rsqrt(var + BN_EPS) * layer["gamma"] + layer["beta"]
        h = z
    return h


if __name__ == "__main__":
    key = jax.random.PRNGKey(0)
    k_x, k_p = jax.random.split(key)

    num_nodes = 16
    # node features: (N, 4) as in data.x for SAGEConv(4, 6)
    x = jax.random.normal(k_x, (num_nodes, 4), jnp.float32)

    # deterministic small graph: directed ring both ways + a chord pattern
    src = jnp.concatenate([
        jnp.arange(num_nodes),
        (jnp.arange(num_nodes) + 1) % num_nodes,
        jnp.arange(num_nodes),
    ])
    dst = jnp.concatenate([
        (jnp.arange(num_nodes) + 1) % num_nodes,
        jnp.arange(num_nodes),
        (jnp.arange(num_nodes) + 5) % num_nodes,
    ])
    edge_index = jnp.stack([src, dst]).astype(jnp.int32)   # (2, 48)

    params = init_params(k_p)

    out = gcn_net_forward(x, edge_index, params)
    out = jax.block_until_ready(out)
    assert out.shape == (num_nodes, 32) and out.dtype == jnp.float32
    assert bool(jnp.all(jnp.isfinite(out)))

    # Gross-error sanity check vs. pure-JAX reference. Loose tolerance because
    # BatchNorm's rsqrt(var + 1e-5) amplifies f32 rounding noise for
    # near-constant channels; structural bugs would show up as O(1) diffs.
    ref = gcn_net_reference(x, edge_index, params)
    assert bool(jnp.allclose(out, ref, atol=5e-2, rtol=5e-2))

    print("KERNEL_OK")
</pallas_src>

<mosaic_0001>
module attributes {stable_mosaic.version = 11 : i64} {
  func.func @gcn_fused_kernel(%arg0: i32, %arg1: memref<16x16xf32, #tpu.memory_space<vmem>>, %arg2: memref<16x32xf32, #tpu.memory_space<vmem>>, %arg3: memref<4x2x32x32xf32, #tpu.memory_space<vmem>>, %arg4: memref<4x3x32xf32, #tpu.memory_space<vmem>>, %arg5: memref<16x32xf32, #tpu.memory_space<vmem>>) attributes {dimension_semantics = [#tpu.dimension_semantics<arbitrary>], iteration_bounds = array<i64: 1>, scalar_prefetch = 0 : i64, scratch_operands = 0 : i64, tpu.core_type = #tpu.core_type<tc>, window_params = [{pipeline_mode = #tpu.pipeline_mode<synchronous>, transform_indices = @transform_0, window_bounds = array<i64: 16, 16>}, {pipeline_mode = #tpu.pipeline_mode<synchronous>, transform_indices = @transform_1, window_bounds = array<i64: 16, 32>}, {pipeline_mode = #tpu.pipeline_mode<synchronous>, transform_indices = @transform_2, window_bounds = array<i64: 4, 2, 32, 32>}, {pipeline_mode = #tpu.pipeline_mode<synchronous>, transform_indices = @transform_3, window_bounds = array<i64: 4, 3, 32>}, {pipeline_mode = #tpu.pipeline_mode<synchronous>, transform_indices = @transform_4, window_bounds = array<i64: 16, 32>}]} {
    %c0 = arith.constant 0 : index
    %c0_0 = arith.constant 0 : index
    %0 = vector.load %arg1[%c0, %c0_0] : memref<16x16xf32, #tpu.memory_space<vmem>>, vector<16x16xf32>
    %c0_1 = arith.constant 0 : index
    %c0_2 = arith.constant 0 : index
    %1 = vector.load %arg2[%c0_1, %c0_2] : memref<16x32xf32, #tpu.memory_space<vmem>>, vector<16x32xf32>
    %c0_3 = arith.constant 0 : index
    %c0_4 = arith.constant 0 : index
    %c0_5 = arith.constant 0 : index
    %c0_6 = arith.constant 0 : index
    %2 = vector.load %arg3[%c0_3, %c0_4, %c0_5, %c0_6] : memref<4x2x32x32xf32, #tpu.memory_space<vmem>>, vector<1x1x32x32xf32>
    %3 = vector.shape_cast %2 : vector<1x1x32x32xf32> to vector<32x32xf32>
    %c0_7 = arith.constant 0 : index
    %c1 = arith.constant 1 : index
    %c0_8 = arith.constant 0 : index
    %c0_9 = arith.constant 0 : index
    %4 = vector.load %arg3[%c0_7, %c1, %c0_8, %c0_9] : memref<4x2x32x32xf32, #tpu.memory_space<vmem>>, vector<1x1x32x32xf32>
    %5 = vector.shape_cast %4 : vector<1x1x32x32xf32> to vector<32x32xf32>
    %c0_10 = arith.constant 0 : index
    %c0_11 = arith.constant 0 : index
    %c0_12 = arith.constant 0 : index
    %6 = vector.load %arg4[%c0_10, %c0_11, %c0_12] : memref<4x3x32xf32, #tpu.memory_space<vmem>>, vector<1x3x32xf32>
    %7 = vector.shape_cast %6 : vector<1x3x32xf32> to vector<3x32xf32>
    %8 = vector.extract_strided_slice %7 {offsets = [0, 0], sizes = [1, 32], strides = [1, 1]} : vector<3x32xf32> to vector<1x32xf32>
    %9 = vector.extract_strided_slice %7 {offsets = [1, 0], sizes = [1, 32], strides = [1, 1]} : vector<3x32xf32> to vector<1x32xf32>
    %10 = vector.extract_strided_slice %7 {offsets = [2, 0], sizes = [1, 32], strides = [1, 1]} : vector<3x32xf32> to vector<1x32xf32>
    %cst = arith.constant dense<0.000000e+00> : vector<16x32xf32>
    %11 = tpu.matmul %0, %1, %cst {dimension_numbers = #tpu.dot_dimension_numbers<[1], [0], [0], [1], [0, 0, 1, 1], [], []>} : vector<16x16xf32>, vector<16x32xf32>, vector<16x32xf32> -> vector<16x32xf32>
    %cst_13 = arith.constant dense<0.000000e+00> : vector<16x32xf32>
    %12 = tpu.matmul %11, %3, %cst_13 {dimension_numbers = #tpu.dot_dimension_numbers<[1], [0], [0], [1], [0, 0, 1, 1], [], []>} : vector<16x32xf32>, vector<32x32xf32>, vector<16x32xf32> -> vector<16x32xf32>
    %cst_14 = arith.constant dense<0.000000e+00> : vector<16x32xf32>
    %13 = tpu.matmul %1, %5, %cst_14 {dimension_numbers = #tpu.dot_dimension_numbers<[1], [0], [0], [1], [0, 0, 1, 1], [], []>} : vector<16x32xf32>, vector<32x32xf32>, vector<16x32xf32> -> vector<16x32xf32>
    %14 = arith.addf %12, %13 : vector<16x32xf32>
    %15 = vector.broadcast %8 : vector<1x32xf32> to vector<16x32xf32>
    %16 = arith.addf %14, %15 : vector<16x32xf32>
    %17 = arith.mulf %16, %16 : vector<16x32xf32>
    %cst_15 = arith.constant dense<0.000000e+00> : vector<16xf32>
    %18 = vector.multi_reduction <add>, %17, %cst_15 [1] : vector<16x32xf32> to vector<16xf32>
    %19 = vector.shape_cast %18 : vector<16xf32> to vector<16x1xf32>
    %cst_16 = arith.constant 1.000000e-24 : f32
    %20 = vector.broadcast %cst_16 : f32 to vector<16x1xf32>
    %21 = arith.maximumf %19, %20 : vector<16x1xf32>
    %22 = math.rsqrt %21 : vector<16x1xf32>
    %23 = vector.broadcast %22 : vector<16x1xf32> to vector<16x32xf32>
    %24 = arith.mulf %16, %23 : vector<16x32xf32>
    %cst_17 = arith.constant 0.000000e+00 : f32
    %25 = vector.broadcast %cst_17 : f32 to vector<16x32xf32>
    %26 = arith.maximumf %24, %25 : vector<16x32xf32>
    %cst_18 = arith.constant dense<0.000000e+00> : vector<32xf32>
    %27 = vector.multi_reduction <add>, %26, %cst_18 [0] : vector<16x32xf32> to vector<32xf32>
    %28 = vector.shape_cast %27 : vector<32xf32> to vector<1x32xf32>
    %cst_19 = arith.constant 6.250000e-02 : f32
    %29 = vector.broadcast %cst_19 : f32 to vector<1x32xf32>
    %30 = arith.mulf %28, %29 : vector<1x32xf32>
    %31 = arith.mulf %26, %26 : vector<16x32xf32>
    %cst_20 = arith.constant dense<0.000000e+00> : vector<32xf32>
    %32 = vector.multi_reduction <add>, %31, %cst_20 [0] : vector<16x32xf32> to vector<32xf32>
    %33 = vector.shape_cast %32 : vector<32xf32> to vector<1x32xf32>
    %cst_21 = arith.constant 6.250000e-02 : f32
    %34 = vector.broadcast %cst_21 : f32 to vector<1x32xf32>
    %35 = arith.mulf %33, %34 : vector<1x32xf32>
    %36 = arith.mulf %30, %30 : vector<1x32xf32>
    %37 = arith.subf %35, %36 : vector<1x32xf32>
    %38 = vector.broadcast %30 : vector<1x32xf32> to vector<16x32xf32>
    %39 = arith.subf %26, %38 : vector<16x32xf32>
    %cst_22 = arith.constant 9.99999974E-6 : f32
    %40 = vector.broadcast %cst_22 : f32 to vector<1x32xf32>
    %41 = arith.addf %37, %40 : vector<1x32xf32>
    %42 = math.rsqrt %41 : vector<1x32xf32>
    %43 = vector.broadcast %42 : vector<1x32xf32> to vector<16x32xf32>
    %44 = arith.mulf %39, %43 : vector<16x32xf32>
    %45 = vector.broadcast %9 : vector<1x32xf32> to vector<16x32xf32>
    %46 = arith.mulf %44, %45 : vector<16x32xf32>
    %47 = vector.broadcast %10 : vector<1x32xf32> to vector<16x32xf32>
    %48 = arith.addf %46, %47 : vector<16x32xf32>
    %c1_23 = arith.constant 1 : index
    %c0_24 = arith.constant 0 : index
    %c0_25 = arith.constant 0 : index
    %c0_26 = arith.constant 0 : index
    %49 = vector.load %arg3[%c1_23, %c0_24, %c0_25, %c0_26] : memref<4x2x32x32xf32, #tpu.memory_space<vmem>>, vector<1x1x32x32xf32>
    %50 = vector.shape_cast %49 : vector<1x1x32x32xf32> to vector<32x32xf32>
    %c1_27 = arith.constant 1 : index
    %c1_28 = arith.constant 1 : index
    %c0_29 = arith.constant 0 : index
    %c0_30 = arith.constant 0 : index
    %51 = vector.load %arg3[%c1_27, %c1_28, %c0_29, %c0_30] : memref<4x2x32x32xf32, #tpu.memory_space<vmem>>, vector<1x1x32x32xf32>
    %52 = vector.shape_cast %51 : vector<1x1x32x32xf32> to vector<32x32xf32>
    %c1_31 = arith.constant 1 : index
    %c0_32 = arith.constant 0 : index
    %c0_33 = arith.constant 0 : index
    %53 = vector.load %arg4[%c1_31, %c0_32, %c0_33] : memref<4x3x32xf32, #tpu.memory_space<vmem>>, vector<1x3x32xf32>
    %54 = vector.shape_cast %53 : vector<1x3x32xf32> to vector<3x32xf32>
    %55 = vector.extract_strided_slice %54 {offsets = [0, 0], sizes = [1, 32], strides = [1, 1]} : vector<3x32xf32> to vector<1x32xf32>
    %56 = vector.extract_strided_slice %54 {offsets = [1, 0], sizes = [1, 32], strides = [1, 1]} : vector<3x32xf32> to vector<1x32xf32>
    %57 = vector.extract_strided_slice %54 {offsets = [2, 0], sizes = [1, 32], strides = [1, 1]} : vector<3x32xf32> to vector<1x32xf32>
    %cst_34 = arith.constant dense<0.000000e+00> : vector<16x32xf32>
    %58 = tpu.matmul %0, %48, %cst_34 {dimension_numbers = #tpu.dot_dimension_numbers<[1], [0], [0], [1], [0, 0, 1, 1], [], []>} : vector<16x16xf32>, vector<16x32xf32>, vector<16x32xf32> -> vector<16x32xf32>
    %cst_35 = arith.constant dense<0.000000e+00> : vector<16x32xf32>
    %59 = tpu.matmul %58, %50, %cst_35 {dimension_numbers = #tpu.dot_dimension_numbers<[1], [0], [0], [1], [0, 0, 1, 1], [], []>} : vector<16x32xf32>, vector<32x32xf32>, vector<16x32xf32> -> vector<16x32xf32>
    %cst_36 = arith.constant dense<0.000000e+00> : vector<16x32xf32>
    %60 = tpu.matmul %48, %52, %cst_36 {dimension_numbers = #tpu.dot_dimension_numbers<[1], [0], [0], [1], [0, 0, 1, 1], [], []>} : vector<16x32xf32>, vector<32x32xf32>, vector<16x32xf32> -> vector<16x32xf32>
    %61 = arith.addf %59, %60 : vector<16x32xf32>
    %62 = vector.broadcast %55 : vector<1x32xf32> to vector<16x32xf32>
    %63 = arith.addf %61, %62 : vector<16x32xf32>
    %64 = arith.mulf %63, %63 : vector<16x32xf32>
    %cst_37 = arith.constant dense<0.000000e+00> : vector<16xf32>
    %65 = vector.multi_reduction <add>, %64, %cst_37 [1] : vector<16x32xf32> to vector<16xf32>
    %66 = vector.shape_cast %65 : vector<16xf32> to vector<16x1xf32>
    %cst_38 = arith.constant 1.000000e-24 : f32
    %67 = vector.broadcast %cst_38 : f32 to vector<16x1xf32>
    %68 = arith.maximumf %66, %67 : vector<16x1xf32>
    %69 = math.rsqrt %68 : vector<16x1xf32>
    %70 = vector.broadcast %69 : vector<16x1xf32> to vector<16x32xf32>
    %71 = arith.mulf %63, %70 : vector<16x32xf32>
    %cst_39 = arith.constant 0.000000e+00 : f32
    %72 = vector.broadcast %cst_39 : f32 to vector<16x32xf32>
    %73 = arith.maximumf %71, %72 : vector<16x32xf32>
    %cst_40 = arith.constant dense<0.000000e+00> : vector<32xf32>
    %74 = vector.multi_reduction <add>, %73, %cst_40 [0] : vector<16x32xf32> to vector<32xf32>
    %75 = vector.shape_cast %74 : vector<32xf32> to vector<1x32xf32>
    %cst_41 = arith.constant 6.250000e-02 : f32
    %76 = vector.broadcast %cst_41 : f32 to vector<1x32xf32>
    %77 = arith.mulf %75, %76 : vector<1x32xf32>
    %78 = arith.mulf %73, %73 : vector<16x32xf32>
    %cst_42 = arith.constant dense<0.000000e+00> : vector<32xf32>
    %79 = vector.multi_reduction <add>, %78, %cst_42 [0] : vector<16x32xf32> to vector<32xf32>
    %80 = vector.shape_cast %79 : vector<32xf32> to vector<1x32xf32>
    %cst_43 = arith.constant 6.250000e-02 : f32
    %81 = vector.broadcast %cst_43 : f32 to vector<1x32xf32>
    %82 = arith.mulf %80, %81 : vector<1x32xf32>
    %83 = arith.mulf %77, %77 : vector<1x32xf32>
    %84 = arith.subf %82, %83 : vector<1x32xf32>
    %85 = vector.broadcast %77 : vector<1x32xf32> to vector<16x32xf32>
    %86 = arith.subf %73, %85 : vector<16x32xf32>
    %cst_44 = arith.constant 9.99999974E-6 : f32
    %87 = vector.broadcast %cst_44 : f32 to vector<1x32xf32>
    %88 = arith.addf %84, %87 : vector<1x32xf32>
    %89 = math.rsqrt %88 : vector<1x32xf32>
    %90 = vector.broadcast %89 : vector<1x32xf32> to vector<16x32xf32>
    %91 = arith.mulf %86, %90 : vector<16x32xf32>
    %92 = vector.broadcast %56 : vector<1x32xf32> to vector<16x32xf32>
    %93 = arith.mulf %91, %92 : vector<16x32xf32>
    %94 = vector.broadcast %57 : vector<1x32xf32> to vector<16x32xf32>
    %95 = arith.addf %93, %94 : vector<16x32xf32>
    %c2 = arith.constant 2 : index
    %c0_45 = arith.constant 0 : index
    %c0_46 = arith.constant 0 : index
    %c0_47 = arith.constant 0 : index
    %96 = vector.load %arg3[%c2, %c0_45, %c0_46, %c0_47] : memref<4x2x32x32xf32, #tpu.memory_space<vmem>>, vector<1x1x32x32xf32>
    %97 = vector.shape_cast %96 : vector<1x1x32x32xf32> to vector<32x32xf32>
    %c2_48 = arith.constant 2 : index
    %c1_49 = arith.constant 1 : index
    %c0_50 = arith.constant 0 : index
    %c0_51 = arith.constant 0 : index
    %98 = vector.load %arg3[%c2_48, %c1_49, %c0_50, %c0_51] : memref<4x2x32x32xf32, #tpu.memory_space<vmem>>, vector<1x1x32x32xf32>
    %99 = vector.shape_cast %98 : vector<1x1x32x32xf32> to vector<32x32xf32>
    %c2_52 = arith.constant 2 : index
    %c0_53 = arith.constant 0 : index
    %c0_54 = arith.constant 0 : index
    %100 = vector.load %arg4[%c2_52, %c0_53, %c0_54] : memref<4x3x32xf32, #tpu.memory_space<vmem>>, vector<1x3x32xf32>
    %101 = vector.shape_cast %100 : vector<1x3x32xf32> to vector<3x32xf32>
    %102 = vector.extract_strided_slice %101 {offsets = [0, 0], sizes = [1, 32], strides = [1, 1]} : vector<3x32xf32> to vector<1x32xf32>
    %103 = vector.extract_strided_slice %101 {offsets = [1, 0], sizes = [1, 32], strides = [1, 1]} : vector<3x32xf32> to vector<1x32xf32>
    %104 = vector.extract_strided_slice %101 {offsets = [2, 0], sizes = [1, 32], strides = [1, 1]} : vector<3x32xf32> to vector<1x32xf32>
    %cst_55 = arith.constant dense<0.000000e+00> : vector<16x32xf32>
    %105 = tpu.matmul %0, %95, %cst_55 {dimension_numbers = #tpu.dot_dimension_numbers<[1], [0], [0], [1], [0, 0, 1, 1], [], []>} : vector<16x16xf32>, vector<16x32xf32>, vector<16x32xf32> -> vector<16x32xf32>
    %cst_56 = arith.constant dense<0.000000e+00> : vector<16x32xf32>
    %106 = tpu.matmul %105, %97, %cst_56 {dimension_numbers = #tpu.dot_dimension_numbers<[1], [0], [0], [1], [0, 0, 1, 1], [], []>} : vector<16x32xf32>, vector<32x32xf32>, vector<16x32xf32> -> vector<16x32xf32>
    %cst_57 = arith.constant dense<0.000000e+00> : vector<16x32xf32>
    %107 = tpu.matmul %95, %99, %cst_57 {dimension_numbers = #tpu.dot_dimension_numbers<[1], [0], [0], [1], [0, 0, 1, 1], [], []>} : vector<16x32xf32>, vector<32x32xf32>, vector<16x32xf32> -> vector<16x32xf32>
    %108 = arith.addf %106, %107 : vector<16x32xf32>
    %109 = vector.broadcast %102 : vector<1x32xf32> to vector<16x32xf32>
    %110 = arith.addf %108, %109 : vector<16x32xf32>
    %111 = arith.mulf %110, %110 : vector<16x32xf32>
    %cst_58 = arith.constant dense<0.000000e+00> : vector<16xf32>
    %112 = vector.multi_reduction <add>, %111, %cst_58 [1] : vector<16x32xf32> to vector<16xf32>
    %113 = vector.shape_cast %112 : vector<16xf32> to vector<16x1xf32>
    %cst_59 = arith.constant 1.000000e-24 : f32
    %114 = vector.broadcast %cst_59 : f32 to vector<16x1xf32>
    %115 = arith.maximumf %113, %114 : vector<16x1xf32>
    %116 = math.rsqrt %115 : vector<16x1xf32>
    %117 = vector.broadcast %116 : vector<16x1xf32> to vector<16x32xf32>
    %118 = arith.mulf %110, %117 : vector<16x32xf32>
    %cst_60 = arith.constant 0.000000e+00 : f32
    %119 = vector.broadcast %cst_60 : f32 to vector<16x32xf32>
    %120 = arith.maximumf %118, %119 : vector<16x32xf32>
    %cst_61 = arith.constant dense<0.000000e+00> : vector<32xf32>
    %121 = vector.multi_reduction <add>, %120, %cst_61 [0] : vector<16x32xf32> to vector<32xf32>
    %122 = vector.shape_cast %121 : vector<32xf32> to vector<1x32xf32>
    %cst_62 = arith.constant 6.250000e-02 : f32
    %123 = vector.broadcast %cst_62 : f32 to vector<1x32xf32>
    %124 = arith.mulf %122, %123 : vector<1x32xf32>
    %125 = arith.mulf %120, %120 : vector<16x32xf32>
    %cst_63 = arith.constant dense<0.000000e+00> : vector<32xf32>
    %126 = vector.multi_reduction <add>, %125, %cst_63 [0] : vector<16x32xf32> to vector<32xf32>
    %127 = vector.shape_cast %126 : vector<32xf32> to vector<1x32xf32>
    %cst_64 = arith.constant 6.250000e-02 : f32
    %128 = vector.broadcast %cst_64 : f32 to vector<1x32xf32>
    %129 = arith.mulf %127, %128 : vector<1x32xf32>
    %130 = arith.mulf %124, %124 : vector<1x32xf32>
    %131 = arith.subf %129, %130 : vector<1x32xf32>
    %132 = vector.broadcast %124 : vector<1x32xf32> to vector<16x32xf32>
    %133 = arith.subf %120, %132 : vector<16x32xf32>
    %cst_65 = arith.constant 9.99999974E-6 : f32
    %134 = vector.broadcast %cst_65 : f32 to vector<1x32xf32>
    %135 = arith.addf %131, %134 : vector<1x32xf32>
    %136 = math.rsqrt %135 : vector<1x32xf32>
    %137 = vector.broadcast %136 : vector<1x32xf32> to vector<16x32xf32>
    %138 = arith.mulf %133, %137 : vector<16x32xf32>
    %139 = vector.broadcast %103 : vector<1x32xf32> to vector<16x32xf32>
    %140 = arith.mulf %138, %139 : vector<16x32xf32>
    %141 = vector.broadcast %104 : vector<1x32xf32> to vector<16x32xf32>
    %142 = arith.addf %140, %141 : vector<16x32xf32>
    %c3 = arith.constant 3 : index
    %c0_66 = arith.constant 0 : index
    %c0_67 = arith.constant 0 : index
    %c0_68 = arith.constant 0 : index
    %143 = vector.load %arg3[%c3, %c0_66, %c0_67, %c0_68] : memref<4x2x32x32xf32, #tpu.memory_space<vmem>>, vector<1x1x32x32xf32>
    %144 = vector.shape_cast %143 : vector<1x1x32x32xf32> to vector<32x32xf32>
    %c3_69 = arith.constant 3 : index
    %c1_70 = arith.constant 1 : index
    %c0_71 = arith.constant 0 : index
    %c0_72 = arith.constant 0 : index
    %145 = vector.load %arg3[%c3_69, %c1_70, %c0_71, %c0_72] : memref<4x2x32x32xf32, #tpu.memory_space<vmem>>, vector<1x1x32x32xf32>
    %146 = vector.shape_cast %145 : vector<1x1x32x32xf32> to vector<32x32xf32>
    %c3_73 = arith.constant 3 : index
    %c0_74 = arith.constant 0 : index
    %c0_75 = arith.constant 0 : index
    %147 = vector.load %arg4[%c3_73, %c0_74, %c0_75] : memref<4x3x32xf32, #tpu.memory_space<vmem>>, vector<1x3x32xf32>
    %148 = vector.shape_cast %147 : vector<1x3x32xf32> to vector<3x32xf32>
    %149 = vector.extract_strided_slice %148 {offsets = [0, 0], sizes = [1, 32], strides = [1, 1]} : vector<3x32xf32> to vector<1x32xf32>
    %cst_76 = arith.constant dense<0.000000e+00> : vector<16x32xf32>
    %150 = tpu.matmul %0, %142, %cst_76 {dimension_numbers = #tpu.dot_dimension_numbers<[1], [0], [0], [1], [0, 0, 1, 1], [], []>} : vector<16x16xf32>, vector<16x32xf32>, vector<16x32xf32> -> vector<16x32xf32>
    %cst_77 = arith.constant dense<0.000000e+00> : vector<16x32xf32>
    %151 = tpu.matmul %150, %144, %cst_77 {dimension_numbers = #tpu.dot_dimension_numbers<[1], [0], [0], [1], [0, 0, 1, 1], [], []>} : vector<16x32xf32>, vector<32x32xf32>, vector<16x32xf32> -> vector<16x32xf32>
    %cst_78 = arith.constant dense<0.000000e+00> : vector<16x32xf32>
    %152 = tpu.matmul %142, %146, %cst_78 {dimension_numbers = #tpu.dot_dimension_numbers<[1], [0], [0], [1], [0, 0, 1, 1], [], []>} : vector<16x32xf32>, vector<32x32xf32>, vector<16x32xf32> -> vector<16x32xf32>
    %153 = arith.addf %151, %152 : vector<16x32xf32>
    %154 = vector.broadcast %149 : vector<1x32xf32> to vector<16x32xf32>
    %155 = arith.addf %153, %154 : vector<16x32xf32>
    %156 = arith.mulf %155, %155 : vector<16x32xf32>
    %cst_79 = arith.constant dense<0.000000e+00> : vector<16xf32>
    %157 = vector.multi_reduction <add>, %156, %cst_79 [1] : vector<16x32xf32> to vector<16xf32>
    %158 = vector.shape_cast %157 : vector<16xf32> to vector<16x1xf32>
    %cst_80 = arith.constant 1.000000e-24 : f32
    %159 = vector.broadcast %cst_80 : f32 to vector<16x1xf32>
    %160 = arith.maximumf %158, %159 : vector<16x1xf32>
    %161 = math.rsqrt %160 : vector<16x1xf32>
    %162 = vector.broadcast %161 : vector<16x1xf32> to vector<16x32xf32>
    %163 = arith.mulf %155, %162 : vector<16x32xf32>
    %cst_81 = arith.constant 0.000000e+00 : f32
    %164 = vector.broadcast %cst_81 : f32 to vector<16x32xf32>
    %165 = arith.maximumf %163, %164 : vector<16x32xf32>
    %c0_82 = arith.constant 0 : index
    %c0_83 = arith.constant 0 : index
    %166 = vector.load %arg5[%c0_82, %c0_83] : memref<16x32xf32, #tpu.memory_space<vmem>>, vector<16x32xf32>
    tpu.vector_store %arg5[%c0_82, %c0_83], %165 {strides = array<i32>} : memref<16x32xf32, #tpu.memory_space<vmem>>, vector<16x32xf32>,
    return
  }
  func.func @transform_0(%arg0: i32) -> (i32, i32) {
    %c0_i32 = arith.constant 0 : i32
    %c0_i32_0 = arith.constant 0 : i32
    %c0_i32_1 = arith.constant 0 : i32
    return %c0_i32, %c0_i32_0 : i32, i32
  }
  func.func @transform_1(%arg0: i32) -> (i32, i32) {
    %c0_i32 = arith.constant 0 : i32
    %c0_i32_0 = arith.constant 0 : i32
    %c0_i32_1 = arith.constant 0 : i32
    return %c0_i32, %c0_i32_0 : i32, i32
  }
  func.func @transform_2(%arg0: i32) -> (i32, i32, i32, i32) {
    %c0_i32 = arith.constant 0 : i32
    %c0_i32_0 = arith.constant 0 : i32
    %c0_i32_1 = arith.constant 0 : i32
    %c0_i32_2 = arith.constant 0 : i32
    %c0_i32_3 = arith.constant 0 : i32
    return %c0_i32, %c0_i32_0, %c0_i32_1, %c0_i32_2 : i32, i32, i32, i32
  }
  func.func @transform_3(%arg0: i32) -> (i32, i32, i32) {
    %c0_i32 = arith.constant 0 : i32
    %c0_i32_0 = arith.constant 0 : i32
    %c0_i32_1 = arith.constant 0 : i32
    %c0_i32_2 = arith.constant 0 : i32
    return %c0_i32, %c0_i32_0, %c0_i32_1 : i32, i32, i32
  }
  func.func @transform_4(%arg0: i32) -> (i32, i32) {
    %c0_i32 = arith.constant 0 : i32
    %c0_i32_0 = arith.constant 0 : i32
    %c0_i32_1 = arith.constant 0 : i32
    return %c0_i32, %c0_i32_0 : i32, i32
  }
}

</mosaic_0001>

<llo_original>
// kernel: tpu_custom_call.1
$region0: #{tpu_custom_call.1}
  #allocation0 [shape = 'u32[]', space=smem, size = 0x4, offset = 0x4, fixed_abs, tag = 'smem constant byte address 0x4 - core index']
  #allocation1 [shape = 'u32[144,128]{1,0:T(1,128)}', space=vmem, size = 0x12000, scoped, tag = 'internal scratch']
  %s0 = inlined_call_operand.vmem [shape: f32[16,16], index: 0, kind: input, shape index: {}]
  %s1 = inlined_call_operand.hbm [shape: f32[16,32], index: 1, kind: input, shape index: {}]
  %s2 = inlined_call_operand.hbm [shape: f32[4,2,32,32], index: 2, kind: input, shape index: {}]
  %s3 = inlined_call_operand.vmem [shape: f32[4,3,32], index: 3, kind: input, shape index: {}]
  %s4 = inlined_call_operand.hbm [shape: f32[16,32], index: 4, kind: output, shape index: {}]
  %s5 = sld [smem:[#allocation0]]
  $region34: #{tpu_custom_call.1} parent=0
    _
  %s7 = ssub.s32 1, %s5
  %s8 = scalar_select 0, %s7, %s5
  $region1: #{tpu_custom_call.1} parent=0
    #allocation2 [shape = 'u8[8192]{0}', space=vmem, size = 0x2000, scoped, tag = 'input window, operand 1, single buffered']
    #allocation3 [shape = 's32[1]{0}', space=sflag, size = 0x4, scoped, tag = 'scoped memory for tpu_custom_call.1']
    #allocation4 [shape = 's32[1]{0}', space=sflag, size = 0x4, scoped, tag = 'scoped memory for tpu_custom_call.1']
    #allocation5 [shape = 'u8[131072]{0}', space=vmem, size = 0x20000, scoped, tag = 'input window, operand 2, single buffered']
    #allocation6 [shape = 's32[1]{0}', space=sflag, size = 0x4, scoped, tag = 'scoped memory for tpu_custom_call.1']
    #allocation7 [shape = 'u8[8192]{0}', space=vmem, size = 0x2000, scoped, tag = 'output window, operand 0, single buffered']
    %9 = vsyncpa [#allocation3], 0
    %10 = vsyncpa [#allocation6], 0
    %11 = vsyncpa [#allocation4], 0
    // Predicated region
    $region2: #{tpu_custom_call.1} parent=1 // pred_check
      _
    $region3: #{tpu_custom_call.1} parent=1 // pred_check_branch
      %13 = sbr.rel (0) target = $region5
    $region4: #{tpu_custom_call.1} parent=1 // pred_region
      _
    $region5: #{tpu_custom_call.1} parent=1 // pred_fallthru
      _
    // Predicated region
    $region6: #{tpu_custom_call.1} parent=1 // pred_check
      _
    $region7: #{tpu_custom_call.1} parent=1 // pred_check_branch
      %15 = sbr.rel (0) target = $region9
    $region8: #{tpu_custom_call.1} parent=1 // pred_region
      %s17 = ssub.s32 256, 256
      %18 = vsyncadd [#allocation3], %s17
      %s19 = sshll.u32 [#allocation2], 4
      %s20 = int_to_ptr.vmem [resolvable:$true] %s19
      %25 = dma.hbm_to_vmem [thread:$0]  %s1, 256, %s20, [#allocation3], 128, 128, 8
    $region9: #{tpu_custom_call.1} parent=1 // pred_fallthru
      _
    // Predicated region
    $region10: #{tpu_custom_call.1} parent=1 // pred_check
      _
    $region11: #{tpu_custom_call.1} parent=1 // pred_check_branch
      %27 = sbr.rel (0) target = $region13
    $region12: #{tpu_custom_call.1} parent=1 // pred_region
      %s29 = ssub.s32 4096, 4096
      %30 = vsyncadd [#allocation6], %s29
      %s31 = sshll.u32 [#allocation5], 4
      %s32 = int_to_ptr.vmem [resolvable:$true] %s31
      %37 = dma.hbm_to_vmem [thread:$0]  %s2, 4096, %s32, [#allocation6], 128, 128, 8
    $region13: #{tpu_custom_call.1} parent=1 // pred_fallthru
      _
    // Predicated region
    $region14: #{tpu_custom_call.1} parent=1 // pred_check
      _
    $region15: #{tpu_custom_call.1} parent=1 // pred_check_branch
      %39 = sbr.rel (0) target = $region17
    $region16: #{tpu_custom_call.1} parent=1 // pred_region
      _
    $region17: #{tpu_custom_call.1} parent=1 // pred_fallthru
      _
    // Predicated region
    $region18: #{tpu_custom_call.1} parent=1 // pred_check
      _
    $region19: #{tpu_custom_call.1} parent=1 // pred_check_branch
      %41 = sbr.rel (0) target = $region21
    $region20: #{tpu_custom_call.1} parent=1 // pred_region
      %42 = dma.done [#allocation3], 256
    $region21: #{tpu_custom_call.1} parent=1 // pred_fallthru
      _
    // Predicated region
    $region22: #{tpu_custom_call.1} parent=1 // pred_check
      _
    $region23: #{tpu_custom_call.1} parent=1 // pred_check_branch
      %44 = sbr.rel (0) target = $region25
    $region24: #{tpu_custom_call.1} parent=1 // pred_region
      %45 = dma.done [#allocation6], 4096
    $region25: #{tpu_custom_call.1} parent=1 // pred_fallthru
      _
    %v46 = vld [vmem:[%s0] sm:$0xff]
    %v47 = vld [vmem:[%s0 + $0x8] sm:$0xff]
    %v48 = vld [vmem:[#allocation2] sm:$0xff]
    %v49 = vld [vmem:[#allocation2 + $0x8] sm:$0xff]
    %v50 = vld [vmem:[#allocation5] sm:$0xff]
    %v51 = vld [vmem:[#allocation5 + $0x8] sm:$0xff]
    %v52 = vld [vmem:[#allocation5 + $0x10] sm:$0xff]
    %v53 = vld [vmem:[#allocation5 + $0x18] sm:$0xff]
    %s54 = scalar_lea.vmem [#allocation5], 32
    %v55 = vld [vmem:[%s54] sm:$0xff]
    %v56 = vld [vmem:[%s54 + $0x8] sm:$0xff]
    %v57 = vld [vmem:[%s54 + $0x10] sm:$0xff]
    %v58 = vld [vmem:[%s54 + $0x18] sm:$0xff]
    %v59 = vld [vmem:[%s3] sm:$0x7]
    %vm60 = vcmask 130048
    %v62 = vsel %vm60, %v46, 0
    %v65 = vsel %vm60, %v47, 0
    %67 = vmatprep.subr.mxu0 0.0
    %68 = vmatpush1.msra.mxu0 %v48
    %69 = vmatprep.subr.mxu0 0.0
    %70 = vmatpush1.msra.mxu0 %v49
    %71 = vmatprep.subr.mxu0 0.0
    %72 = vmatpush1.msra.mxu0 0.0
    %73 = vmatprep.subr.mxu0 0.0
    %74 = vmatpush1.msra.mxu0 0.0
    %75 = vmatprep.subr.mxu0 0.0
    %76 = vmatpush1.msra.mxu0 0.0
    %77 = vmatprep.subr.mxu0 0.0
    %78 = vmatpush1.msra.mxu0 0.0
    %79 = vmatprep.subr.mxu0 0.0
    %80 = vmatpush1.msra.mxu0 0.0
    %81 = vmatprep.subr.mxu0 0.0
    %82 = vmatpush1.msra.mxu0 0.0
    %83 = vmatprep.subr.mxu0 0.0
    %84 = vmatpush1.msra.mxu0 0.0
    %85 = vmatprep.subr.mxu0 0.0
    %86 = vmatpush1.msra.mxu0 0.0
    %87 = vmatprep.subr.mxu0 0.0
    %88 = vmatpush1.msra.mxu0 0.0
    %89 = vmatprep.subr.mxu0 0.0
    %90 = vmatpush1.msra.mxu0 0.0
    %91 = vmatprep.subr.mxu0 0.0
    %92 = vmatpush1.msra.mxu0 0.0
    %93 = vmatprep.subr.mxu0 0.0
    %94 = vmatpush1.msra.mxu0 0.0
    %95 = vmatprep.subr.mxu0 0.0
    %96 = vmatpush1.msra.mxu0 0.0
    %97 = vmatprep.subr.mxu0 0.0
    %98 = vmatpush1.msra.mxu0 0.0
    %99 = vmatprep.subr.mxu0 0.0
    %100 = vmatpush1.msra.mxu0 0.0
    %101 = vmatprep.subr.mxu0 0.0
    %102 = vmatpush1.msra.mxu0 0.0
    %103 = vmatprep.subr.mxu0 0.0
    %104 = vmatpush1.msra.mxu0 0.0
    %105 = vmatprep.subr.mxu0 0.0
    %106 = vmatpush1.msra.mxu0 0.0
    %107 = vmatprep.subr.mxu0 0.0
    %108 = vmatpush1.msra.mxu0 0.0
    %109 = vmatprep.subr.mxu0 0.0
    %110 = vmatpush1.msra.mxu0 0.0
    %111 = vmatprep.subr.mxu0 0.0
    %112 = vmatpush1.msra.mxu0 0.0
    %113 = vmatprep.subr.mxu0 0.0
    %114 = vmatpush1.msra.mxu0 0.0
    %115 = vmatprep.subr.mxu0 0.0
    %116 = vmatpush1.msra.mxu0 0.0
    %117 = vmatprep.subr.mxu0 0.0
    %118 = vmatpush1.msra.mxu0 0.0
    %119 = vmatprep.subr.mxu0 0.0
    %120 = vmatpush1.msra.mxu0 0.0
    %121 = vmatprep.subr.mxu0 0.0
    %122 = vmatpush1.msra.mxu0 0.0
    %123 = vmatprep.subr.mxu0 0.0
    %124 = vmatpush1.msra.mxu0 0.0
    %125 = vmatprep.subr.mxu0 0.0
    %126 = vmatpush1.msra.mxu0 0.0
    %127 = vmatprep.subr.mxu0 0.0
    %128 = vmatpush1.msra.mxu0 0.0
    %129 = vmatprep.subr.mxu0 0.0
    %130 = vmatpush1.msra.mxu0 0.0
    %131 = vmatprep.mubr.f32.mxu0 0.0
    %132 = vmatmul.mubr.f32.gmra.mrb[0].mxu0 %v62
    %v133 = vpop.f32.mrb[0].mxu0
    %v134 = vadd.f32 0.0, %v133
    %v135 = vpop.f32.mrb[0].mxu0
    %136 = vmatprep.mubr.f32.mxu0 0.0
    %137 = vmatmul.mubr.f32.gmra.mrb[0].mxu0 %v65
    %v138 = vpop.f32.mrb[0].mxu0
    %v139 = vadd.f32 0.0, %v138
    %v140 = vpop.f32.mrb[0].mxu0
    %141 = vdwg.mxu0
    %vm142 = vcmask 261120
    %v144 = vsel %vm142, %v48, 0
    %v147 = vsel %vm142, %v49, 0
    %149 = vmatprep.subr.mxu0 0.0
    %150 = vmatpush1.msra.mxu0 %v55
    %151 = vmatprep.subr.mxu0 0.0
    %152 = vmatpush1.msra.mxu0 %v56
    %153 = vmatprep.subr.mxu0 0.0
    %154 = vmatpush1.msra.mxu0 %v57
    %155 = vmatprep.subr.mxu0 0.0
    %156 = vmatpush1.msra.mxu0 %v58
    %157 = vmatprep.subr.mxu0 0.0
    %158 = vmatpush1.msra.mxu0 0.0
    %159 = vmatprep.subr.mxu0 0.0
    %160 = vmatpush1.msra.mxu0 0.0
    %161 = vmatprep.subr.mxu0 0.0
    %162 = vmatpush1.msra.mxu0 0.0
    %163 = vmatprep.subr.mxu0 0.0
    %164 = vmatpush1.msra.mxu0 0.0
    %165 = vmatprep.subr.mxu0 0.0
    %166 = vmatpush1.msra.mxu0 0.0
    %167 = vmatprep.subr.mxu0 0.0
    %168 = vmatpush1.msra.mxu0 0.0
    %169 = vmatprep.subr.mxu0 0.0
    %170 = vmatpush1.msra.mxu0 0.0
    %171 = vmatprep.subr.mxu0 0.0
    %172 = vmatpush1.msra.mxu0 0.0
    %173 = vmatprep.subr.mxu0 0.0
    %174 = vmatpush1.msra.mxu0 0.0
    %175 = vmatprep.subr.mxu0 0.0
    %176 = vmatpush1.msra.mxu0 0.0
    %177 = vmatprep.subr.mxu0 0.0
    %178 = vmatpush1.msra.mxu0 0.0
    %179 = vmatprep.subr.mxu0 0.0
    %180 = vmatpush1.msra.mxu0 0.0
    %181 = vmatprep.subr.mxu0 0.0
    %182 = vmatpush1.msra.mxu0 0.0
    %183 = vmatprep.subr.mxu0 0.0
    %184 = vmatpush1.msra.mxu0 0.0
    %185 = vmatprep.subr.mxu0 0.0
    %186 = vmatpush1.msra.mxu0 0.0
    %187 = vmatprep.subr.mxu0 0.0
    %188 = vmatpush1.msra.mxu0 0.0
    %189 = vmatprep.subr.mxu0 0.0
    %190 = vmatpush1.msra.mxu0 0.0
    %191 = vmatprep.subr.mxu0 0.0
    %192 = vmatpush1.msra.mxu0 0.0
    %193 = vmatprep.subr.mxu0 0.0
    %194 = vmatpush1.msra.mxu0 0.0
    %195 = vmatprep.subr.mxu0 0.0
    %196 = vmatpush1.msra.mxu0 0.0
    %197 = vmatprep.subr.mxu0 0.0
    %198 = vmatpush1.msra.mxu0 0.0
    %199 = vmatprep.subr.mxu0 0.0
    %200 = vmatpush1.msra.mxu0 0.0
    %201 = vmatprep.subr.mxu0 0.0
    %202 = vmatpush1.msra.mxu0 0.0
    %203 = vmatprep.subr.mxu0 0.0
    %204 = vmatpush1.msra.mxu0 0.0
    %205 = vmatprep.subr.mxu0 0.0
    %206 = vmatpush1.msra.mxu0 0.0
    %207 = vmatprep.subr.mxu0 0.0
    %208 = vmatpush1.msra.mxu0 0.0
    %209 = vmatprep.subr.mxu0 0.0
    %210 = vmatpush1.msra.mxu0 0.0
    %211 = vmatprep.subr.mxu0 0.0
    %212 = vmatpush1.msra.mxu0 0.0
    %213 = vmatprep.mubr.f32.mxu0 0.0
    %214 = vmatmul.mubr.f32.gmra.mrb[0].mxu0 %v144
    %v215 = vpop.f32.mrb[0].mxu0
    %v216 = vadd.f32 0.0, %v215
    %v217 = vpop.f32.mrb[0].mxu0
    %218 = vmatprep.mubr.f32.mxu0 0.0
    %219 = vmatmul.mubr.f32.gmra.mrb[0].mxu0 %v147
    %v220 = vpop.f32.mrb[0].mxu0
    %v221 = vadd.f32 0.0, %v220
    %v222 = vpop.f32.mrb[0].mxu0
    %223 = vdwg.mxu0
    %v225 = vsel %vm142, %v134, 0
    %v228 = vsel %vm142, %v139, 0
    %230 = vmatprep.subr.mxu0 0.0
    %231 = vmatpush1.msra.mxu0 %v50
    %232 = vmatprep.subr.mxu0 0.0
    %233 = vmatpush1.msra.mxu0 %v51
    %234 = vmatprep.subr.mxu0 0.0
    %235 = vmatpush1.msra.mxu0 %v52
    %236 = vmatprep.subr.mxu0 0.0
    %237 = vmatpush1.msra.mxu0 %v53
    %238 = vmatprep.subr.mxu0 0.0
    %239 = vmatpush1.msra.mxu0 0.0
    %240 = vmatprep.subr.mxu0 0.0
    %241 = vmatpush1.msra.mxu0 0.0
    %242 = vmatprep.subr.mxu0 0.0
    %243 = vmatpush1.msra.mxu0 0.0
    %244 = vmatprep.subr.mxu0 0.0
    %245 = vmatpush1.msra.mxu0 0.0
    %246 = vmatprep.subr.mxu0 0.0
    %247 = vmatpush1.msra.mxu0 0.0
    %248 = vmatprep.subr.mxu0 0.0
    %249 = vmatpush1.msra.mxu0 0.0
    %250 = vmatprep.subr.mxu0 0.0
    %251 = vmatpush1.msra.mxu0 0.0
    %252 = vmatprep.subr.mxu0 0.0
    %253 = vmatpush1.msra.mxu0 0.0
    %254 = vmatprep.subr.mxu0 0.0
    %255 = vmatpush1.msra.mxu0 0.0
    %256 = vmatprep.subr.mxu0 0.0
    %257 = vmatpush1.msra.mxu0 0.0
    %258 = vmatprep.subr.mxu0 0.0
    %259 = vmatpush1.msra.mxu0 0.0
    %260 = vmatprep.subr.mxu0 0.0
    %261 = vmatpush1.msra.mxu0 0.0
    %262 = vmatprep.subr.mxu0 0.0
    %263 = vmatpush1.msra.mxu0 0.0
    %264 = vmatprep.subr.mxu0 0.0
    %265 = vmatpush1.msra.mxu0 0.0
    %266 = vmatprep.subr.mxu0 0.0
    %267 = vmatpush1.msra.mxu0 0.0
    %268 = vmatprep.subr.mxu0 0.0
    %269 = vmatpush1.msra.mxu0 0.0
    %270 = vmatprep.subr.mxu0 0.0
    %271 = vmatpush1.msra.mxu0 0.0
    %272 = vmatprep.subr.mxu0 0.0
    %273 = vmatpush1.msra.mxu0 0.0
    %274 = vmatprep.subr.mxu0 0.0
    %275 = vmatpush1.msra.mxu0 0.0
    %276 = vmatprep.subr.mxu0 0.0
    %277 = vmatpush1.msra.mxu0 0.0
    %278 = vmatprep.subr.mxu0 0.0
    %279 = vmatpush1.msra.mxu0 0.0
    %280 = vmatprep.subr.mxu0 0.0
    %281 = vmatpush1.msra.mxu0 0.0
    %282 = vmatprep.subr.mxu0 0.0
    %283 = vmatpush1.msra.mxu0 0.0
    %284 = vmatprep.subr.mxu0 0.0
    %285 = vmatpush1.msra.mxu0 0.0
    %286 = vmatprep.subr.mxu0 0.0
    %287 = vmatpush1.msra.mxu0 0.0
    %288 = vmatprep.subr.mxu0 0.0
    %289 = vmatpush1.msra.mxu0 0.0
    %290 = vmatprep.subr.mxu0 0.0
    %291 = vmatpush1.msra.mxu0 0.0
    %292 = vmatprep.subr.mxu0 0.0
    %293 = vmatpush1.msra.mxu0 0.0
    %294 = vmatprep.mubr.f32.mxu0 0.0
    %295 = vmatmul.mubr.f32.gmra.mrb[0].mxu0 %v225
    %v296 = vpop.f32.mrb[0].mxu0
    %v297 = vadd.f32 %v216, %v296
    %v298 = vpop.f32.mrb[0].mxu0
    %299 = vmatprep.mubr.f32.mxu0 0.0
    %300 = vmatmul.mubr.f32.gmra.mrb[0].mxu0 %v228
    %v301 = vpop.f32.mrb[0].mxu0
    %v302 = vadd.f32 %v221, %v301
    %v303 = vpop.f32.mrb[0].mxu0
    %304 = vdwg.mxu0
    %v305 = vlaneseq
    %v306 = vshrl.u32 %v305, 7
    %v307 = vsub.s32 0, %v306
    %v308 = vrot.slane %v59, %v307
    %v309 = vadd.f32 %v297, %v308
    %v310 = vadd.f32 %v302, %v308
    %v311 = vmul.f32 %v309, %v309
    %v312 = vmul.f32 %v310, %v310
    %v313 = vsel %vm142, %v311, 0.0
    %314 = vadd.xlane.f32.xlu0 %v313
    %v315 = vpop.xlane.xlu0 %314
    %v316 = vsel %vm142, %v312, 0.0
    %317 = vadd.xlane.f32.xlu0 %v316
    %v318 = vpop.xlane.xlu0 %317
    %v319 = vmax.f32 %v315, 1e-24
    %v320 = vmax.f32 %v318, 1e-24
    %v321 = vrsqrt.pop %v319
    %v322 = vrsqrt.pop %v320
    %v323 = vmul.f32 %v309, %v321
    %v324 = vmul.f32 %v310, %v322
    %v325 = vmax.f32 %v323, 0.0
    %v326 = vmax.f32 %v324, 0.0
    %v327 = vsel %vm142, %v325, 0.0
    %v328 = vsel %vm142, %v326, 0.0
    %v329 = vadd.f32 %v327, %v328
    %v330 = vrot.slane %v329, 4
    %v331 = vadd.f32 %v329, %v330
    %v332 = vrot.slane %v331, 2
    %v333 = vadd.f32 %v331, %v332
    %v334 = vrot.slane %v333, 1
    %v335 = vadd.f32 %v333, %v334
    %v336 = vmul.f32 %v335, 0.0625
    %v337 = vmul.f32 %v325, %v325
    %v338 = vmul.f32 %v326, %v326
    %v339 = vsel %vm142, %v337, 0.0
    %v340 = vsel %vm142, %v338, 0.0
    %v341 = vadd.f32 %v339, %v340
    %v342 = vrot.slane %v341, 4
    %v343 = vadd.f32 %v341, %v342
    %v344 = vrot.slane %v343, 2
    %v345 = vadd.f32 %v343, %v344
    %v346 = vrot.slane %v345, 1
    %v347 = vadd.f32 %v345, %v346
    %v348 = vmul.f32 %v347, 0.0625
    %v349 = vmul.f32 %v336, %v336
    %v350 = vsub.f32 %v348, %v349
    %v351 = vsub.f32 %v325, %v336
    %v352 = vsub.f32 %v326, %v336
    %v353 = vadd.f32 %v350, 1e-05
    %v354 = vrsqrt.pop %v353
    %v355 = vmul.f32 %v351, %v354
    %v356 = vmul.f32 %v352, %v354
    %v357 = vlaneseq
    %v358 = vshrl.u32 %v357, 7
    %v359 = vsub.s32 1, %v358
    %v360 = vrot.slane %v59, %v359
    %v361 = vmul.f32 %v355, %v360
    %v362 = vmul.f32 %v356, %v360
    %v363 = vlaneseq
    %v364 = vshrl.u32 %v363, 7
    %v365 = vsub.s32 2, %v364
    %v366 = vrot.slane %v59, %v365
    %v367 = vadd.f32 %v361, %v366
    %v368 = vadd.f32 %v362, %v366
    %s369 = scalar_lea.vmem [#allocation5], 64
    %v370 = vld [vmem:[%s369] sm:$0xff]
    %v371 = vld [vmem:[%s369 + $0x8] sm:$0xff]
    %v372 = vld [vmem:[%s369 + $0x10] sm:$0xff]
    %v373 = vld [vmem:[%s369 + $0x18] sm:$0xff]
    %s374 = scalar_lea.vmem [#allocation5], 96
    %v375 = vld [vmem:[%s374] sm:$0xff]
    %v376 = vld [vmem:[%s374 + $0x8] sm:$0xff]
    %v377 = vld [vmem:[%s374 + $0x10] sm:$0xff]
    %v378 = vld [vmem:[%s374 + $0x18] sm:$0xff]
    %s379 = scalar_lea.vmem %s3, 4
    %v380 = vld [vmem:[%s379] sm:$0x7]
    %381 = vmatprep.subr.mxu0 0.0
    %382 = vmatpush1.msra.mxu0 %v367
    %383 = vmatprep.subr.mxu0 0.0
    %384 = vmatpush1.msra.mxu0 %v368
    %385 = vmatprep.subr.mxu0 0.0
    %386 = vmatpush1.msra.mxu0 0.0
    %387 = vmatprep.subr.mxu0 0.0
    %388 = vmatpush1.msra.mxu0 0.0
    %389 = vmatprep.subr.mxu0 0.0
    %390 = vmatpush1.msra.mxu0 0.0
    %391 = vmatprep.subr.mxu0 0.0
    %392 = vmatpush1.msra.mxu0 0.0
    %393 = vmatprep.subr.mxu0 0.0
    %394 = vmatpush1.msra.mxu0 0.0
    %395 = vmatprep.subr.mxu0 0.0
    %396 = vmatpush1.msra.mxu0 0.0
    %397 = vmatprep.subr.mxu0 0.0
    %398 = vmatpush1.msra.mxu0 0.0
    %399 = vmatprep.subr.mxu0 0.0
    %400 = vmatpush1.msra.mxu0 0.0
    %401 = vmatprep.subr.mxu0 0.0
    %402 = vmatpush1.msra.mxu0 0.0
    %403 = vmatprep.subr.mxu0 0.0
    %404 = vmatpush1.msra.mxu0 0.0
    %405 = vmatprep.subr.mxu0 0.0
    %406 = vmatpush1.msra.mxu0 0.0
    %407 = vmatprep.subr.mxu0 0.0
    %408 = vmatpush1.msra.mxu0 0.0
    %409 = vmatprep.subr.mxu0 0.0
    %410 = vmatpush1.msra.mxu0 0.0
    %411 = vmatprep.subr.mxu0 0.0
    %412 = vmatpush1.msra.mxu0 0.0
    %413 = vmatprep.subr.mxu0 0.0
    %414 = vmatpush1.msra.mxu0 0.0
    %415 = vmatprep.subr.mxu0 0.0
    %416 = vmatpush1.msra.mxu0 0.0
    %417 = vmatprep.subr.mxu0 0.0
    %418 = vmatpush1.msra.mxu0 0.0
    %419 = vmatprep.subr.mxu0 0.0
    %420 = vmatpush1.msra.mxu0 0.0
    %421 = vmatprep.subr.mxu0 0.0
    %422 = vmatpush1.msra.mxu0 0.0
    %423 = vmatprep.subr.mxu0 0.0
    %424 = vmatpush1.msra.mxu0 0.0
    %425 = vmatprep.subr.mxu0 0.0
    %426 = vmatpush1.msra.mxu0 0.0
    %427 = vmatprep.subr.mxu0 0.0
    %428 = vmatpush1.msra.mxu0 0.0
    %429 = vmatprep.subr.mxu0 0.0
    %430 = vmatpush1.msra.mxu0 0.0
    %431 = vmatprep.subr.mxu0 0.0
    %432 = vmatpush1.msra.mxu0 0.0
    %433 = vmatprep.subr.mxu0 0.0
    %434 = vmatpush1.msra.mxu0 0.0
    %435 = vmatprep.subr.mxu0 0.0
    %436 = vmatpush1.msra.mxu0 0.0
    %437 = vmatprep.subr.mxu0 0.0
    %438 = vmatpush1.msra.mxu0 0.0
    %439 = vmatprep.subr.mxu0 0.0
    %440 = vmatpush1.msra.mxu0 0.0
    %441 = vmatprep.subr.mxu0 0.0
    %442 = vmatpush1.msra.mxu0 0.0
    %443 = vmatprep.subr.mxu0 0.0
    %444 = vmatpush1.msra.mxu0 0.0
    %445 = vmatprep.mubr.f32.mxu0 0.0
    %446 = vmatmul.mubr.f32.gmra.mrb[0].mxu0 %v62
    %v447 = vpop.f32.mrb[0].mxu0
    %v448 = vadd.f32 0.0, %v447
    %v449 = vpop.f32.mrb[0].mxu0
    %450 = vmatprep.mubr.f32.mxu0 0.0
    %451 = vmatmul.mubr.f32.gmra.mrb[0].mxu0 %v65
    %v452 = vpop.f32.mrb[0].mxu0
    %v453 = vadd.f32 0.0, %v452
    %v454 = vpop.f32.mrb[0].mxu0
    %455 = vdwg.mxu0
    %v457 = vsel %vm142, %v367, 0
    %v460 = vsel %vm142, %v368, 0
    %462 = vmatprep.subr.mxu0 0.0
    %463 = vmatpush1.msra.mxu0 %v375
    %464 = vmatprep.subr.mxu0 0.0
    %465 = vmatpush1.msra.mxu0 %v376
    %466 = vmatprep.subr.mxu0 0.0
    %467 = vmatpush1.msra.mxu0 %v377
    %468 = vmatprep.subr.mxu0 0.0
    %469 = vmatpush1.msra.mxu0 %v378
    %470 = vmatprep.subr.mxu0 0.0
    %471 = vmatpush1.msra.mxu0 0.0
    %472 = vmatprep.subr.mxu0 0.0
    %473 = vmatpush1.msra.mxu0 0.0
    %474 = vmatprep.subr.mxu0 0.0
    %475 = vmatpush1.msra.mxu0 0.0
    %476 = vmatprep.subr.mxu0 0.0
    %477 = vmatpush1.msra.mxu0 0.0
    %478 = vmatprep.subr.mxu0 0.0
    %479 = vmatpush1.msra.mxu0 0.0
    %480 = vmatprep.subr.mxu0 0.0
    %481 = vmatpush1.msra.mxu0 0.0
    %482 = vmatprep.subr.mxu0 0.0
    %483 = vmatpush1.msra.mxu0 0.0
    %484 = vmatprep.subr.mxu0 0.0
    %485 = vmatpush1.msra.mxu0 0.0
    %486 = vmatprep.subr.mxu0 0.0
    %487 = vmatpush1.msra.mxu0 0.0
    %488 = vmatprep.subr.mxu0 0.0
    %489 = vmatpush1.msra.mxu0 0.0
    %490 = vmatprep.subr.mxu0 0.0
    %491 = vmatpush1.msra.mxu0 0.0
    %492 = vmatprep.subr.mxu0 0.0
    %493 = vmatpush1.msra.mxu0 0.0
    %494 = vmatprep.subr.mxu0 0.0
    %495 = vmatpush1.msra.mxu0 0.0
    %496 = vmatprep.subr.mxu0 0.0
    %497 = vmatpush1.msra.mxu0 0.0
    %498 = vmatprep.subr.mxu0 0.0
    %499 = vmatpush1.msra.mxu0 0.0
    %500 = vmatprep.subr.mxu0 0.0
    %501 = vmatpush1.msra.mxu0 0.0
    %502 = vmatprep.subr.mxu0 0.0
    %503 = vmatpush1.msra.mxu0 0.0
    %504 = vmatprep.subr.mxu0 0.0
    %505 = vmatpush1.msra.mxu0 0.0
    %506 = vmatprep.subr.mxu0 0.0
    %507 = vmatpush1.msra.mxu0 0.0
    %508 = vmatprep.subr.mxu0 0.0
    %509 = vmatpush1.msra.mxu0 0.0
    %510 = vmatprep.subr.mxu0 0.0
    %511 = vmatpush1.msra.mxu0 0.0
    %512 = vmatprep.subr.mxu0 0.0
    %513 = vmatpush1.msra.mxu0 0.0
    %514 = vmatprep.subr.mxu0 0.0
    %515 = vmatpush1.msra.mxu0 0.0
    %516 = vmatprep.subr.mxu0 0.0
    %517 = vmatpush1.msra.mxu0 0.0
    %518 = vmatprep.subr.mxu0 0.0
    %519 = vmatpush1.msra.mxu0 0.0
    %520 = vmatprep.subr.mxu0 0.0
    %521 = vmatpush1.msra.mxu0 0.0
    %522 = vmatprep.subr.mxu0 0.0
    %523 = vmatpush1.msra.mxu0 0.0
    %524 = vmatprep.subr.mxu0 0.0
    %525 = vmatpush1.msra.mxu0 0.0
    %526 = vmatprep.mubr.f32.mxu0 0.0
    %527 = vmatmul.mubr.f32.gmra.mrb[0].mxu0 %v457
    %v528 = vpop.f32.mrb[0].mxu0
    %v529 = vadd.f32 0.0, %v528
    %v530 = vpop.f32.mrb[0].mxu0
    %531 = vmatprep.mubr.f32.mxu0 0.0
    %532 = vmatmul.mubr.f32.gmra.mrb[0].mxu0 %v460
    %v533 = vpop.f32.mrb[0].mxu0
    %v534 = vadd.f32 0.0, %v533
    %v535 = vpop.f32.mrb[0].mxu0
    %536 = vdwg.mxu0
    %v538 = vsel %vm142, %v448, 0
    %v541 = vsel %vm142, %v453, 0
    %543 = vmatprep.subr.mxu0 0.0
    %544 = vmatpush1.msra.mxu0 %v370
    %545 = vmatprep.subr.mxu0 0.0
    %546 = vmatpush1.msra.mxu0 %v371
    %547 = vmatprep.subr.mxu0 0.0
    %548 = vmatpush1.msra.mxu0 %v372
    %549 = vmatprep.subr.mxu0 0.0
    %550 = vmatpush1.msra.mxu0 %v373
    %551 = vmatprep.subr.mxu0 0.0
    %552 = vmatpush1.msra.mxu0 0.0
    %553 = vmatprep.subr.mxu0 0.0
    %554 = vmatpush1.msra.mxu0 0.0
    %555 = vmatprep.subr.mxu0 0.0
    %556 = vmatpush1.msra.mxu0 0.0
    %557 = vmatprep.subr.mxu0 0.0
    %558 = vmatpush1.msra.mxu0 0.0
    %559 = vmatprep.subr.mxu0 0.0
    %560 = vmatpush1.msra.mxu0 0.0
    %561 = vmatprep.subr.mxu0 0.0
    %562 = vmatpush1.msra.mxu0 0.0
    %563 = vmatprep.subr.mxu0 0.0
    %564 = vmatpush1.msra.mxu0 0.0
    %565 = vmatprep.subr.mxu0 0.0
    %566 = vmatpush1.msra.mxu0 0.0
    %567 = vmatprep.subr.mxu0 0.0
    %568 = vmatpush1.msra.mxu0 0.0
    %569 = vmatprep.subr.mxu0 0.0
    %570 = vmatpush1.msra.mxu0 0.0
    %571 = vmatprep.subr.mxu0 0.0
    %572 = vmatpush1.msra.mxu0 0.0
    %573 = vmatprep.subr.mxu0 0.0
    %574 = vmatpush1.msra.mxu0 0.0
    %575 = vmatprep.subr.mxu0 0.0
    %576 = vmatpush1.msra.mxu0 0.0
    %577 = vmatprep.subr.mxu0 0.0
    %578 = vmatpush1.msra.mxu0 0.0
    %579 = vmatprep.subr.mxu0 0.0
    %580 = vmatpush1.msra.mxu0 0.0
    %581 = vmatprep.subr.mxu0 0.0
    %582 = vmatpush1.msra.mxu0 0.0
    %583 = vmatprep.subr.mxu0 0.0
    %584 = vmatpush1.msra.mxu0 0.0
    %585 = vmatprep.subr.mxu0 0.0
    %586 = vmatpush1.msra.mxu0 0.0
    %587 = vmatprep.subr.mxu0 0.0
    %588 = vmatpush1.msra.mxu0 0.0
    %589 = vmatprep.subr.mxu0 0.0
    %590 = vmatpush1.msra.mxu0 0.0
    %591 = vmatprep.subr.mxu0 0.0
    %592 = vmatpush1.msra.mxu0 0.0
    %593 = vmatprep.subr.mxu0 0.0
    %594 = vmatpush1.msra.mxu0 0.0
    %595 = vmatprep.subr.mxu0 0.0
    %596 = vmatpush1.msra.mxu0 0.0
    %597 = vmatprep.subr.mxu0 0.0
    %598 = vmatpush1.msra.mxu0 0.0
    %599 = vmatprep.subr.mxu0 0.0
    %600 = vmatpush1.msra.mxu0 0.0
    %601 = vmatprep.subr.mxu0 0.0
    %602 = vmatpush1.msra.mxu0 0.0
    %603 = vmatprep.subr.mxu0 0.0
    %604 = vmatpush1.msra.mxu0 0.0
    %605 = vmatprep.subr.mxu0 0.0
    %606 = vmatpush1.msra.mxu0 0.0
    %607 = vmatprep.mubr.f32.mxu0 0.0
    %608 = vmatmul.mubr.f32.gmra.mrb[0].mxu0 %v538
    %v609 = vpop.f32.mrb[0].mxu0
    %v610 = vadd.f32 %v529, %v609
    %v611 = vpop.f32.mrb[0].mxu0
    %612 = vmatprep.mubr.f32.mxu0 0.0
    %613 = vmatmul.mubr.f32.gmra.mrb[0].mxu0 %v541
    %v614 = vpop.f32.mrb[0].mxu0
    %v615 = vadd.f32 %v534, %v614
    %v616 = vpop.f32.mrb[0].mxu0
    %617 = vdwg.mxu0
    %v618 = vlaneseq
    %v619 = vshrl.u32 %v618, 7
    %v620 = vsub.s32 0, %v619
    %v621 = vrot.slane %v380, %v620
    %v622 = vadd.f32 %v610, %v621
    %v623 = vadd.f32 %v615, %v621
    %v624 = vmul.f32 %v622, %v622
    %v625 = vmul.f32 %v623, %v623
    %v626 = vsel %vm142, %v624, 0.0
    %627 = vadd.xlane.f32.xlu0 %v626
    %v628 = vpop.xlane.xlu0 %627
    %v629 = vsel %vm142, %v625, 0.0
    %630 = vadd.xlane.f32.xlu0 %v629
    %v631 = vpop.xlane.xlu0 %630
    %v632 = vmax.f32 %v628, 1e-24
    %v633 = vmax.f32 %v631, 1e-24
    %v634 = vrsqrt.pop %v632
    %v635 = vrsqrt.pop %v633
    %v636 = vmul.f32 %v622, %v634
    %v637 = vmul.f32 %v623, %v635
    %v638 = vmax.f32 %v636, 0.0
    %v639 = vmax.f32 %v637, 0.0
    %v640 = vsel %vm142, %v638, 0.0
    %v641 = vsel %vm142, %v639, 0.0
    %v642 = vadd.f32 %v640, %v641
    %v643 = vrot.slane %v642, 4
    %v644 = vadd.f32 %v642, %v643
    %v645 = vrot.slane %v644, 2
    %v646 = vadd.f32 %v644, %v645
    %v647 = vrot.slane %v646, 1
    %v648 = vadd.f32 %v646, %v647
    %v649 = vmul.f32 %v648, 0.0625
    %v650 = vmul.f32 %v638, %v638
    %v651 = vmul.f32 %v639, %v639
    %v652 = vsel %vm142, %v650, 0.0
    %v653 = vsel %vm142, %v651, 0.0
    %v654 = vadd.f32 %v652, %v653
    %v655 = vrot.slane %v654, 4
    %v656 = vadd.f32 %v654, %v655
    %v657 = vrot.slane %v656, 2
    %v658 = vadd.f32 %v656, %v657
    %v659 = vrot.slane %v658, 1
    %v660 = vadd.f32 %v658, %v659
    %v661 = vmul.f32 %v660, 0.0625
    %v662 = vmul.f32 %v649, %v649
    %v663 = vsub.f32 %v661, %v662
    %v664 = vsub.f32 %v638, %v649
    %v665 = vsub.f32 %v639, %v649
    %v666 = vadd.f32 %v663, 1e-05
    %v667 = vrsqrt.pop %v666
    %v668 = vmul.f32 %v664, %v667
    %v669 = vmul.f32 %v665, %v667
    %v670 = vlaneseq
    %v671 = vshrl.u32 %v670, 7
    %v672 = vsub.s32 1, %v671
    %v673 = vrot.slane %v380, %v672
    %v674 = vmul.f32 %v668, %v673
    %v675 = vmul.f32 %v669, %v673
    %v676 = vlaneseq
    %v677 = vshrl.u32 %v676, 7
    %v678 = vsub.s32 2, %v677
    %v679 = vrot.slane %v380, %v678
    %v680 = vadd.f32 %v674, %v679
    %v681 = vadd.f32 %v675, %v679
    %s682 = scalar_lea.vmem [#allocation5], 128
    %v683 = vld [vmem:[%s682] sm:$0xff]
    %v684 = vld [vmem:[%s682 + $0x8] sm:$0xff]
    %v685 = vld [vmem:[%s682 + $0x10] sm:$0xff]
    %v686 = vld [vmem:[%s682 + $0x18] sm:$0xff]
    %s687 = scalar_lea.vmem [#allocation5], 160
    %v688 = vld [vmem:[%s687] sm:$0xff]
    %v689 = vld [vmem:[%s687 + $0x8] sm:$0xff]
    %v690 = vld [vmem:[%s687 + $0x10] sm:$0xff]
    %v691 = vld [vmem:[%s687 + $0x18] sm:$0xff]
    %s692 = scalar_lea.vmem %s3, 8
    %v693 = vld [vmem:[%s692] sm:$0x7]
    %694 = vmatprep.subr.mxu0 0.0
    %695 = vmatpush1.msra.mxu0 %v680
    %696 = vmatprep.subr.mxu0 0.0
    %697 = vmatpush1.msra.mxu0 %v681
    %698 = vmatprep.subr.mxu0 0.0
    %699 = vmatpush1.msra.mxu0 0.0
    %700 = vmatprep.subr.mxu0 0.0
    %701 = vmatpush1.msra.mxu0 0.0
    %702 = vmatprep.subr.mxu0 0.0
    %703 = vmatpush1.msra.mxu0 0.0
    %704 = vmatprep.subr.mxu0 0.0
    %705 = vmatpush1.msra.mxu0 0.0
    %706 = vmatprep.subr.mxu0 0.0
    %707 = vmatpush1.msra.mxu0 0.0
    %708 = vmatprep.subr.mxu0 0.0
    %709 = vmatpush1.msra.mxu0 0.0
    %710 = vmatprep.subr.mxu0 0.0
    %711 = vmatpush1.msra.mxu0 0.0
    %712 = vmatprep.subr.mxu0 0.0
    %713 = vmatpush1.msra.mxu0 0.0
    %714 = vmatprep.subr.mxu0 0.0
    %715 = vmatpush1.msra.mxu0 0.0
    %716 = vmatprep.subr.mxu0 0.0
    %717 = vmatpush1.msra.mxu0 0.0
    %718 = vmatprep.subr.mxu0 0.0
    %719 = vmatpush1.msra.mxu0 0.0
    %720 = vmatprep.subr.mxu0 0.0
    %721 = vmatpush1.msra.mxu0 0.0
    %722 = vmatprep.subr.mxu0 0.0
    %723 = vmatpush1.msra.mxu0 0.0
    %724 = vmatprep.subr.mxu0 0.0
    %725 = vmatpush1.msra.mxu0 0.0
    %726 = vmatprep.subr.mxu0 0.0
    %727 = vmatpush1.msra.mxu0 0.0
    %728 = vmatprep.subr.mxu0 0.0
    %729 = vmatpush1.msra.mxu0 0.0
    %730 = vmatprep.subr.mxu0 0.0
    %731 = vmatpush1.msra.mxu0 0.0
    %732 = vmatprep.subr.mxu0 0.0
    %733 = vmatpush1.msra.mxu0 0.0
    %734 = vmatprep.subr.mxu0 0.0
    %735 = vmatpush1.msra.mxu0 0.0
    %736 = vmatprep.subr.mxu0 0.0
    %737 = vmatpush1.msra.mxu0 0.0
    %738 = vmatprep.subr.mxu0 0.0
    %739 = vmatpush1.msra.mxu0 0.0
    %740 = vmatprep.subr.mxu0 0.0
    %741 = vmatpush1.msra.mxu0 0.0
    %742 = vmatprep.subr.mxu0 0.0
    %743 = vmatpush1.msra.mxu0 0.0
    %744 = vmatprep.subr.mxu0 0.0
    %745 = vmatpush1.msra.mxu0 0.0
    %746 = vmatprep.subr.mxu0 0.0
    %747 = vmatpush1.msra.mxu0 0.0
    %748 = vmatprep.subr.mxu0 0.0
    %749 = vmatpush1.msra.mxu0 0.0
    %750 = vmatprep.subr.mxu0 0.0
    %751 = vmatpush1.msra.mxu0 0.0
    %752 = vmatprep.subr.mxu0 0.0
    %753 = vmatpush1.msra.mxu0 0.0
    %754 = vmatprep.subr.mxu0 0.0
    %755 = vmatpush1.msra.mxu0 0.0
    %756 = vmatprep.subr.mxu0 0.0
    %757 = vmatpush1.msra.mxu0 0.0
    %758 = vmatprep.mubr.f32.mxu0 0.0
    %759 = vmatmul.mubr.f32.gmra.mrb[0].mxu0 %v62
    %v760 = vpop.f32.mrb[0].mxu0
    %v761 = vadd.f32 0.0, %v760
    %v762 = vpop.f32.mrb[0].mxu0
    %763 = vmatprep.mubr.f32.mxu0 0.0
    %764 = vmatmul.mubr.f32.gmra.mrb[0].mxu0 %v65
    %v765 = vpop.f32.mrb[0].mxu0
    %v766 = vadd.f32 0.0, %v765
    %v767 = vpop.f32.mrb[0].mxu0
    %768 = vdwg.mxu0
    %v770 = vsel %vm142, %v680, 0
    %v773 = vsel %vm142, %v681, 0
    %775 = vmatprep.subr.mxu0 0.0
    %776 = vmatpush1.msra.mxu0 %v688
    %777 = vmatprep.subr.mxu0 0.0
    %778 = vmatpush1.msra.mxu0 %v689
    %779 = vmatprep.subr.mxu0 0.0
    %780 = vmatpush1.msra.mxu0 %v690
    %781 = vmatprep.subr.mxu0 0.0
    %782 = vmatpush1.msra.mxu0 %v691
    %783 = vmatprep.subr.mxu0 0.0
    %784 = vmatpush1.msra.mxu0 0.0
    %785 = vmatprep.subr.mxu0 0.0
    %786 = vmatpush1.msra.mxu0 0.0
    %787 = vmatprep.subr.mxu0 0.0
    %788 = vmatpush1.msra.mxu0 0.0
    %789 = vmatprep.subr.mxu0 0.0
    %790 = vmatpush1.msra.mxu0 0.0
    %791 = vmatprep.subr.mxu0 0.0
    %792 = vmatpush1.msra.mxu0 0.0
    %793 = vmatprep.subr.mxu0 0.0
    %794 = vmatpush1.msra.mxu0 0.0
    %795 = vmatprep.subr.mxu0 0.0
    %796 = vmatpush1.msra.mxu0 0.0
    %797 = vmatprep.subr.mxu0 0.0
    %798 = vmatpush1.msra.mxu0 0.0
    %799 = vmatprep.subr.mxu0 0.0
    %800 = vmatpush1.msra.mxu0 0.0
    %801 = vmatprep.subr.mxu0 0.0
    %802 = vmatpush1.msra.mxu0 0.0
    %803 = vmatprep.subr.mxu0 0.0
    %804 = vmatpush1.msra.mxu0 0.0
    %805 = vmatprep.subr.mxu0 0.0
    %806 = vmatpush1.msra.mxu0 0.0
    %807 = vmatprep.subr.mxu0 0.0
    %808 = vmatpush1.msra.mxu0 0.0
    %809 = vmatprep.subr.mxu0 0.0
    %810 = vmatpush1.msra.mxu0 0.0
    %811 = vmatprep.subr.mxu0 0.0
    %812 = vmatpush1.msra.mxu0 0.0
    %813 = vmatprep.subr.mxu0 0.0
    %814 = vmatpush1.msra.mxu0 0.0
    %815 = vmatprep.subr.mxu0 0.0
    %816 = vmatpush1.msra.mxu0 0.0
    %817 = vmatprep.subr.mxu0 0.0
    %818 = vmatpush1.msra.mxu0 0.0
    %819 = vmatprep.subr.mxu0 0.0
    %820 = vmatpush1.msra.mxu0 0.0
    %821 = vmatprep.subr.mxu0 0.0
    %822 = vmatpush1.msra.mxu0 0.0
    %823 = vmatprep.subr.mxu0 0.0
    %824 = vmatpush1.msra.mxu0 0.0
    %825 = vmatprep.subr.mxu0 0.0
    %826 = vmatpush1.msra.mxu0 0.0
    %827 = vmatprep.subr.mxu0 0.0
    %828 = vmatpush1.msra.mxu0 0.0
    %829 = vmatprep.subr.mxu0 0.0
    %830 = vmatpush1.msra.mxu0 0.0
    %831 = vmatprep.subr.mxu0 0.0
    %832 = vmatpush1.msra.mxu0 0.0
    %833 = vmatprep.subr.mxu0 0.0
    %834 = vmatpush1.msra.mxu0 0.0
    %835 = vmatprep.subr.mxu0 0.0
    %836 = vmatpush1.msra.mxu0 0.0
    %837 = vmatprep.subr.mxu0 0.0
    %838 = vmatpush1.msra.mxu0 0.0
    %839 = vmatprep.mubr.f32.mxu0 0.0
    %840 = vmatmul.mubr.f32.gmra.mrb[0].mxu0 %v770
    %v841 = vpop.f32.mrb[0].mxu0
    %v842 = vadd.f32 0.0, %v841
    %v843 = vpop.f32.mrb[0].mxu0
    %844 = vmatprep.mubr.f32.mxu0 0.0
    %845 = vmatmul.mubr.f32.gmra.mrb[0].mxu0 %v773
    %v846 = vpop.f32.mrb[0].mxu0
    %v847 = vadd.f32 0.0, %v846
    %v848 = vpop.f32.mrb[0].mxu0
    %849 = vdwg.mxu0
    %v851 = vsel %vm142, %v761, 0
    %v854 = vsel %vm142, %v766, 0
    %856 = vmatprep.subr.mxu0 0.0
    %857 = vmatpush1.msra.mxu0 %v683
    %858 = vmatprep.subr.mxu0 0.0
    %859 = vmatpush1.msra.mxu0 %v684
    %860 = vmatprep.subr.mxu0 0.0
    %861 = vmatpush1.msra.mxu0 %v685
    %862 = vmatprep.subr.mxu0 0.0
    %863 = vmatpush1.msra.mxu0 %v686
    %864 = vmatprep.subr.mxu0 0.0
    %865 = vmatpush1.msra.mxu0 0.0
    %866 = vmatprep.subr.mxu0 0.0
    %867 = vmatpush1.msra.mxu0 0.0
    %868 = vmatprep.subr.mxu0 0.0
    %869 = vmatpush1.msra.mxu0 0.0
    %870 = vmatprep.subr.mxu0 0.0
    %871 = vmatpush1.msra.mxu0 0.0
    %872 = vmatprep.subr.mxu0 0.0
    %873 = vmatpush1.msra.mxu0 0.0
    %874 = vmatprep.subr.mxu0 0.0
    %875 = vmatpush1.msra.mxu0 0.0
    %876 = vmatprep.subr.mxu0 0.0
    %877 = vmatpush1.msra.mxu0 0.0
    %878 = vmatprep.subr.mxu0 0.0
    %879 = vmatpush1.msra.mxu0 0.0
    %880 = vmatprep.subr.mxu0 0.0
    %881 = vmatpush1.msra.mxu0 0.0
    %882 = vmatprep.subr.mxu0 0.0
    %883 = vmatpush1.msra.mxu0 0.0
    %884 = vmatprep.subr.mxu0 0.0
    %885 = vmatpush1.msra.mxu0 0.0
    %886 = vmatprep.subr.mxu0 0.0
    %887 = vmatpush1.msra.mxu0 0.0
    %888 = vmatprep.subr.mxu0 0.0
    %889 = vmatpush1.msra.mxu0 0.0
    %890 = vmatprep.subr.mxu0 0.0
    %891 = vmatpush1.msra.mxu0 0.0
    %892 = vmatprep.subr.mxu0 0.0
    %893 = vmatpush1.msra.mxu0 0.0
    %894 = vmatprep.subr.mxu0 0.0
    %895 = vmatpush1.msra.mxu0 0.0
    %896 = vmatprep.subr.mxu0 0.0
    %897 = vmatpush1.msra.mxu0 0.0
    %898 = vmatprep.subr.mxu0 0.0
    %899 = vmatpush1.msra.mxu0 0.0
    %900 = vmatprep.subr.mxu0 0.0
    %901 = vmatpush1.msra.mxu0 0.0
    %902 = vmatprep.subr.mxu0 0.0
    %903 = vmatpush1.msra.mxu0 0.0
    %904 = vmatprep.subr.mxu0 0.0
    %905 = vmatpush1.msra.mxu0 0.0
    %906 = vmatprep.subr.mxu0 0.0
    %907 = vmatpush1.msra.mxu0 0.0
    %908 = vmatprep.subr.mxu0 0.0
    %909 = vmatpush1.msra.mxu0 0.0
    %910 = vmatprep.subr.mxu0 0.0
    %911 = vmatpush1.msra.mxu0 0.0
    %912 = vmatprep.subr.mxu0 0.0
    %913 = vmatpush1.msra.mxu0 0.0
    %914 = vmatprep.subr.mxu0 0.0
    %915 = vmatpush1.msra.mxu0 0.0
    %916 = vmatprep.subr.mxu0 0.0
    %917 = vmatpush1.msra.mxu0 0.0
    %918 = vmatprep.subr.mxu0 0.0
    %919 = vmatpush1.msra.mxu0 0.0
    %920 = vmatprep.mubr.f32.mxu0 0.0
    %921 = vmatmul.mubr.f32.gmra.mrb[0].mxu0 %v851
    %v922 = vpop.f32.mrb[0].mxu0
    %v923 = vadd.f32 %v842, %v922
    %v924 = vpop.f32.mrb[0].mxu0
    %925 = vmatprep.mubr.f32.mxu0 0.0
    %926 = vmatmul.mubr.f32.gmra.mrb[0].mxu0 %v854
    %v927 = vpop.f32.mrb[0].mxu0
    %v928 = vadd.f32 %v847, %v927
    %v929 = vpop.f32.mrb[0].mxu0
    %930 = vdwg.mxu0
    %v931 = vlaneseq
    %v932 = vshrl.u32 %v931, 7
    %v933 = vsub.s32 0, %v932
    %v934 = vrot.slane %v693, %v933
    %v935 = vadd.f32 %v923, %v934
    %v936 = vadd.f32 %v928, %v934
    %v937 = vmul.f32 %v935, %v935
    %v938 = vmul.f32 %v936, %v936
    %v939 = vsel %vm142, %v937, 0.0
    %940 = vadd.xlane.f32.xlu0 %v939
    %v941 = vpop.xlane.xlu0 %940
    %v942 = vsel %vm142, %v938, 0.0
    %943 = vadd.xlane.f32.xlu0 %v942
    %v944 = vpop.xlane.xlu0 %943
    %v945 = vmax.f32 %v941, 1e-24
    %v946 = vmax.f32 %v944, 1e-24
    %v947 = vrsqrt.pop %v945
    %v948 = vrsqrt.pop %v946
    %v949 = vmul.f32 %v935, %v947
    %v950 = vmul.f32 %v936, %v948
    %v951 = vmax.f32 %v949, 0.0
    %v952 = vmax.f32 %v950, 0.0
    %v953 = vsel %vm142, %v951, 0.0
    %v954 = vsel %vm142, %v952, 0.0
    %v955 = vadd.f32 %v953, %v954
    %v956 = vrot.slane %v955, 4
    %v957 = vadd.f32 %v955, %v956
    %v958 = vrot.slane %v957, 2
    %v959 = vadd.f32 %v957, %v958
    %v960 = vrot.slane %v959, 1
    %v961 = vadd.f32 %v959, %v960
    %v962 = vmul.f32 %v961, 0.0625
    %v963 = vmul.f32 %v951, %v951
    %v964 = vmul.f32 %v952, %v952
    %v965 = vsel %vm142, %v963, 0.0
    %v966 = vsel %vm142, %v964, 0.0
    %v967 = vadd.f32 %v965, %v966
    %v968 = vrot.slane %v967, 4
    %v969 = vadd.f32 %v967, %v968
    %v970 = vrot.slane %v969, 2
    %v971 = vadd.f32 %v969, %v970
    %v972 = vrot.slane %v971, 1
    %v973 = vadd.f32 %v971, %v972
    %v974 = vmul.f32 %v973, 0.0625
    %v975 = vmul.f32 %v962, %v962
    %v976 = vsub.f32 %v974, %v975
    %v977 = vsub.f32 %v951, %v962
    %v978 = vsub.f32 %v952, %v962
    %v979 = vadd.f32 %v976, 1e-05
    %v980 = vrsqrt.pop %v979
    %v981 = vmul.f32 %v977, %v980
    %v982 = vmul.f32 %v978, %v980
    %v983 = vlaneseq
    %v984 = vshrl.u32 %v983, 7
    %v985 = vsub.s32 1, %v984
    %v986 = vrot.slane %v693, %v985
    %v987 = vmul.f32 %v981, %v986
    %v988 = vmul.f32 %v982, %v986
    %v989 = vlaneseq
    %v990 = vshrl.u32 %v989, 7
    %v991 = vsub.s32 2, %v990
    %v992 = vrot.slane %v693, %v991
    %v993 = vadd.f32 %v987, %v992
    %v994 = vadd.f32 %v988, %v992
    %s995 = scalar_lea.vmem [#allocation5], 192
    %v996 = vld [vmem:[%s995] sm:$0xff]
    %v997 = vld [vmem:[%s995 + $0x8] sm:$0xff]
    %v998 = vld [vmem:[%s995 + $0x10] sm:$0xff]
    %v999 = vld [vmem:[%s995 + $0x18] sm:$0xff]
    %s1000 = scalar_lea.vmem [#allocation5], 224
    %v1001 = vld [vmem:[%s1000] sm:$0xff]
    %v1002 = vld [vmem:[%s1000 + $0x8] sm:$0xff]
    %v1003 = vld [vmem:[%s1000 + $0x10] sm:$0xff]
    %v1004 = vld [vmem:[%s1000 + $0x18] sm:$0xff]
    %s1005 = scalar_lea.vmem %s3, 12
    %v1006 = vld [vmem:[%s1005] sm:$0x7]
    %1007 = vmatprep.subr.mxu0 0.0
    %1008 = vmatpush1.msra.mxu0 %v993
    %1009 = vmatprep.subr.mxu0 0.0
    %1010 = vmatpush1.msra.mxu0 %v994
    %1011 = vmatprep.subr.mxu0 0.0
    %1012 = vmatpush1.msra.mxu0 0.0
    %1013 = vmatprep.subr.mxu0 0.0
    %1014 = vmatpush1.msra.mxu0 0.0
    %1015 = vmatprep.subr.mxu0 0.0
    %1016 = vmatpush1.msra.mxu0 0.0
    %1017 = vmatprep.subr.mxu0 0.0
    %1018 = vmatpush1.msra.mxu0 0.0
    %1019 = vmatprep.subr.mxu0 0.0
    %1020 = vmatpush1.msra.mxu0 0.0
    %1021 = vmatprep.subr.mxu0 0.0
    %1022 = vmatpush1.msra.mxu0 0.0
    %1023 = vmatprep.subr.mxu0 0.0
    %1024 = vmatpush1.msra.mxu0 0.0
    %1025 = vmatprep.subr.mxu0 0.0
    %1026 = vmatpush1.msra.mxu0 0.0
    %1027 = vmatprep.subr.mxu0 0.0
    %1028 = vmatpush1.msra.mxu0 0.0
    %1029 = vmatprep.subr.mxu0 0.0
    %1030 = vmatpush1.msra.mxu0 0.0
    %1031 = vmatprep.subr.mxu0 0.0
    %1032 = vmatpush1.msra.mxu0 0.0
    %1033 = vmatprep.subr.mxu0 0.0
    %1034 = vmatpush1.msra.mxu0 0.0
    %1035 = vmatprep.subr.mxu0 0.0
    %1036 = vmatpush1.msra.mxu0 0.0
    %1037 = vmatprep.subr.mxu0 0.0
    %1038 = vmatpush1.msra.mxu0 0.0
    %1039 = vmatprep.subr.mxu0 0.0
    %1040 = vmatpush1.msra.mxu0 0.0
    %1041 = vmatprep.subr.mxu0 0.0
    %1042 = vmatpush1.msra.mxu0 0.0
    %1043 = vmatprep.subr.mxu0 0.0
    %1044 = vmatpush1.msra.mxu0 0.0
    %1045 = vmatprep.subr.mxu0 0.0
    %1046 = vmatpush1.msra.mxu0 0.0
    %1047 = vmatprep.subr.mxu0 0.0
    %1048 = vmatpush1.msra.mxu0 0.0
    %1049 = vmatprep.subr.mxu0 0.0
    %1050 = vmatpush1.msra.mxu0 0.0
    %1051 = vmatprep.subr.mxu0 0.0
    %1052 = vmatpush1.msra.mxu0 0.0
    %1053 = vmatprep.subr.mxu0 0.0
    %1054 = vmatpush1.msra.mxu0 0.0
    %1055 = vmatprep.subr.mxu0 0.0
    %1056 = vmatpush1.msra.mxu0 0.0
    %1057 = vmatprep.subr.mxu0 0.0
    %1058 = vmatpush1.msra.mxu0 0.0
    %1059 = vmatprep.subr.mxu0 0.0
    %1060 = vmatpush1.msra.mxu0 0.0
    %1061 = vmatprep.subr.mxu0 0.0
    %1062 = vmatpush1.msra.mxu0 0.0
    %1063 = vmatprep.subr.mxu0 0.0
    %1064 = vmatpush1.msra.mxu0 0.0
    %1065 = vmatprep.subr.mxu0 0.0
    %1066 = vmatpush1.msra.mxu0 0.0
    %1067 = vmatprep.subr.mxu0 0.0
    %1068 = vmatpush1.msra.mxu0 0.0
    %1069 = vmatprep.subr.mxu0 0.0
    %1070 = vmatpush1.msra.mxu0 0.0
    %1071 = vmatprep.mubr.f32.mxu0 0.0
    %1072 = vmatmul.mubr.f32.gmra.mrb[0].mxu0 %v62
    %v1073 = vpop.f32.mrb[0].mxu0
    %v1074 = vadd.f32 0.0, %v1073
    %v1075 = vpop.f32.mrb[0].mxu0
    %1076 = vmatprep.mubr.f32.mxu0 0.0
    %1077 = vmatmul.mubr.f32.gmra.mrb[0].mxu0 %v65
    %v1078 = vpop.f32.mrb[0].mxu0
    %v1079 = vadd.f32 0.0, %v1078
    %v1080 = vpop.f32.mrb[0].mxu0
    %1081 = vdwg.mxu0
    %v1083 = vsel %vm142, %v993, 0
    %v1086 = vsel %vm142, %v994, 0
    %1088 = vmatprep.subr.mxu0 0.0
    %1089 = vmatpush1.msra.mxu0 %v1001
    %1090 = vmatprep.subr.mxu0 0.0
    %1091 = vmatpush1.msra.mxu0 %v1002
    %1092 = vmatprep.subr.mxu0 0.0
    %1093 = vmatpush1.msra.mxu0 %v1003
    %1094 = vmatprep.subr.mxu0 0.0
    %1095 = vmatpush1.msra.mxu0 %v1004
    %1096 = vmatprep.subr.mxu0 0.0
    %1097 = vmatpush1.msra.mxu0 0.0
    %1098 = vmatprep.subr.mxu0 0.0
    %1099 = vmatpush1.msra.mxu0 0.0
    %1100 = vmatprep.subr.mxu0 0.0
    %1101 = vmatpush1.msra.mxu0 0.0
    %1102 = vmatprep.subr.mxu0 0.0
    %1103 = vmatpush1.msra.mxu0 0.0
    %1104 = vmatprep.subr.mxu0 0.0
    %1105 = vmatpush1.msra.mxu0 0.0
    %1106 = vmatprep.subr.mxu0 0.0
    %1107 = vmatpush1.msra.mxu0 0.0
    %1108 = vmatprep.subr.mxu0 0.0
    %1109 = vmatpush1.msra.mxu0 0.0
    %1110 = vmatprep.subr.mxu0 0.0
    %1111 = vmatpush1.msra.mxu0 0.0
    %1112 = vmatprep.subr.mxu0 0.0
    %1113 = vmatpush1.msra.mxu0 0.0
    %1114 = vmatprep.subr.mxu0 0.0
    %1115 = vmatpush1.msra.mxu0 0.0
    %1116 = vmatprep.subr.mxu0 0.0
    %1117 = vmatpush1.msra.mxu0 0.0
    %1118 = vmatprep.subr.mxu0 0.0
    %1119 = vmatpush1.msra.mxu0 0.0
    %1120 = vmatprep.subr.mxu0 0.0
    %1121 = vmatpush1.msra.mxu0 0.0
    %1122 = vmatprep.subr.mxu0 0.0
    %1123 = vmatpush1.msra.mxu0 0.0
    %1124 = vmatprep.subr.mxu0 0.0
    %1125 = vmatpush1.msra.mxu0 0.0
    %1126 = vmatprep.subr.mxu0 0.0
    %1127 = vmatpush1.msra.mxu0 0.0
    %1128 = vmatprep.subr.mxu0 0.0
    %1129 = vmatpush1.msra.mxu0 0.0
    %1130 = vmatprep.subr.mxu0 0.0
    %1131 = vmatpush1.msra.mxu0 0.0
    %1132 = vmatprep.subr.mxu0 0.0
    %1133 = vmatpush1.msra.mxu0 0.0
    %1134 = vmatprep.subr.mxu0 0.0
    %1135 = vmatpush1.msra.mxu0 0.0
    %1136 = vmatprep.subr.mxu0 0.0
    %1137 = vmatpush1.msra.mxu0 0.0
    %1138 = vmatprep.subr.mxu0 0.0
    %1139 = vmatpush1.msra.mxu0 0.0
    %1140 = vmatprep.subr.mxu0 0.0
    %1141 = vmatpush1.msra.mxu0 0.0
    %1142 = vmatprep.subr.mxu0 0.0
    %1143 = vmatpush1.msra.mxu0 0.0
    %1144 = vmatprep.subr.mxu0 0.0
    %1145 = vmatpush1.msra.mxu0 0.0
    %1146 = vmatprep.subr.mxu0 0.0
    %1147 = vmatpush1.msra.mxu0 0.0
    %1148 = vmatprep.subr.mxu0 0.0
    %1149 = vmatpush1.msra.mxu0 0.0
    %1150 = vmatprep.subr.mxu0 0.0
    %1151 = vmatpush1.msra.mxu0 0.0
    %1152 = vmatprep.mubr.f32.mxu0 0.0
    %1153 = vmatmul.mubr.f32.gmra.mrb[0].mxu0 %v1083
    %v1154 = vpop.f32.mrb[0].mxu0
    %v1155 = vadd.f32 0.0, %v1154
    %v1156 = vpop.f32.mrb[0].mxu0
    %1157 = vmatprep.mubr.f32.mxu0 0.0
    %1158 = vmatmul.mubr.f32.gmra.mrb[0].mxu0 %v1086
    %v1159 = vpop.f32.mrb[0].mxu0
    %v1160 = vadd.f32 0.0, %v1159
    %v1161 = vpop.f32.mrb[0].mxu0
    %1162 = vdwg.mxu0
    %v1164 = vsel %vm142, %v1074, 0
    %v1167 = vsel %vm142, %v1079, 0
    %1169 = vmatprep.subr.mxu0 0.0
    %1170 = vmatpush1.msra.mxu0 %v996
    %1171 = vmatprep.subr.mxu0 0.0
    %1172 = vmatpush1.msra.mxu0 %v997
    %1173 = vmatprep.subr.mxu0 0.0
    %1174 = vmatpush1.msra.mxu0 %v998
    %1175 = vmatprep.subr.mxu0 0.0
    %1176 = vmatpush1.msra.mxu0 %v999
    %1177 = vmatprep.subr.mxu0 0.0
    %1178 = vmatpush1.msra.mxu0 0.0
    %1179 = vmatprep.subr.mxu0 0.0
    %1180 = vmatpush1.msra.mxu0 0.0
    %1181 = vmatprep.subr.mxu0 0.0
    %1182 = vmatpush1.msra.mxu0 0.0
    %1183 = vmatprep.subr.mxu0 0.0
    %1184 = vmatpush1.msra.mxu0 0.0
    %1185 = vmatprep.subr.mxu0 0.0
    %1186 = vmatpush1.msra.mxu0 0.0
    %1187 = vmatprep.subr.mxu0 0.0
    %1188 = vmatpush1.msra.mxu0 0.0
    %1189 = vmatprep.subr.mxu0 0.0
    %1190 = vmatpush1.msra.mxu0 0.0
    %1191 = vmatprep.subr.mxu0 0.0
    %1192 = vmatpush1.msra.mxu0 0.0
    %1193 = vmatprep.subr.mxu0 0.0
    %1194 = vmatpush1.msra.mxu0 0.0
    %1195 = vmatprep.subr.mxu0 0.0
    %1196 = vmatpush1.msra.mxu0 0.0
    %1197 = vmatprep.subr.mxu0 0.0
    %1198 = vmatpush1.msra.mxu0 0.0
    %1199 = vmatprep.subr.mxu0 0.0
    %1200 = vmatpush1.msra.mxu0 0.0
    %1201 = vmatprep.subr.mxu0 0.0
    %1202 = vmatpush1.msra.mxu0 0.0
    %1203 = vmatprep.subr.mxu0 0.0
    %1204 = vmatpush1.msra.mxu0 0.0
    %1205 = vmatprep.subr.mxu0 0.0
    %1206 = vmatpush1.msra.mxu0 0.0
    %1207 = vmatprep.subr.mxu0 0.0
    %1208 = vmatpush1.msra.mxu0 0.0
    %1209 = vmatprep.subr.mxu0 0.0
    %1210 = vmatpush1.msra.mxu0 0.0
    %1211 = vmatprep.subr.mxu0 0.0
    %1212 = vmatpush1.msra.mxu0 0.0
    %1213 = vmatprep.subr.mxu0 0.0
    %1214 = vmatpush1.msra.mxu0 0.0
    %1215 = vmatprep.subr.mxu0 0.0
    %1216 = vmatpush1.msra.mxu0 0.0
    %1217 = vmatprep.subr.mxu0 0.0
    %1218 = vmatpush1.msra.mxu0 0.0
    %1219 = vmatprep.subr.mxu0 0.0
    %1220 = vmatpush1.msra.mxu0 0.0
    %1221 = vmatprep.subr.mxu0 0.0
    %1222 = vmatpush1.msra.mxu0 0.0
    %1223 = vmatprep.subr.mxu0 0.0
    %1224 = vmatpush1.msra.mxu0 0.0
    %1225 = vmatprep.subr.mxu0 0.0
    %1226 = vmatpush1.msra.mxu0 0.0
    %1227 = vmatprep.subr.mxu0 0.0
    %1228 = vmatpush1.msra.mxu0 0.0
    %1229 = vmatprep.subr.mxu0 0.0
    %1230 = vmatpush1.msra.mxu0 0.0
    %1231 = vmatprep.subr.mxu0 0.0
    %1232 = vmatpush1.msra.mxu0 0.0
    %1233 = vmatprep.mubr.f32.mxu0 0.0
    %1234 = vmatmul.mubr.f32.gmra.mrb[0].mxu0 %v1164
    %v1235 = vpop.f32.mrb[0].mxu0
    %v1236 = vadd.f32 %v1155, %v1235
    %v1237 = vpop.f32.mrb[0].mxu0
    %1238 = vmatprep.mubr.f32.mxu0 0.0
    %1239 = vmatmul.mubr.f32.gmra.mrb[0].mxu0 %v1167
    %v1240 = vpop.f32.mrb[0].mxu0
    %v1241 = vadd.f32 %v1160, %v1240
    %v1242 = vpop.f32.mrb[0].mxu0
    %1243 = vdwg.mxu0
    %v1244 = vlaneseq
    %v1245 = vshrl.u32 %v1244, 7
    %v1246 = vsub.s32 0, %v1245
    %v1247 = vrot.slane %v1006, %v1246
    %v1248 = vadd.f32 %v1236, %v1247
    %v1249 = vadd.f32 %v1241, %v1247
    %v1250 = vmul.f32 %v1248, %v1248
    %v1251 = vmul.f32 %v1249, %v1249
    %v1252 = vsel %vm142, %v1250, 0.0
    %1253 = vadd.xlane.f32.xlu0 %v1252
    %v1254 = vpop.xlane.xlu0 %1253
    %v1255 = vsel %vm142, %v1251, 0.0
    %1256 = vadd.xlane.f32.xlu0 %v1255
    %v1257 = vpop.xlane.xlu0 %1256
    %v1258 = vmax.f32 %v1254, 1e-24
    %v1259 = vmax.f32 %v1257, 1e-24
    %v1260 = vrsqrt.pop %v1258
    %v1261 = vrsqrt.pop %v1259
    %v1262 = vmul.f32 %v1248, %v1260
    %v1263 = vmul.f32 %v1249, %v1261
    %v1264 = vmax.f32 %v1262, 0.0
    %v1265 = vmax.f32 %v1263, 0.0
    %1266 = vst.msk [vmem:[#allocation7] sm:$0xff] %vm142, %v1264
    %1267 = vst.msk [vmem:[#allocation7 + $0x8] sm:$0xff] %vm142, %v1265
    // Predicated region
    $region26: #{tpu_custom_call.1} parent=1 // pred_check
      _
    $region27: #{tpu_custom_call.1} parent=1 // pred_check_branch
      %1269 = sbr.rel (0) target = $region29
    $region28: #{tpu_custom_call.1} parent=1 // pred_region
      %s1271 = ssub.s32 256, 256
      %1272 = vsyncadd [#allocation4], %s1271
      %s1273 = sshll.u32 [#allocation7], 4
      %s1274 = int_to_ptr.vmem [resolvable:$true] %s1273
      %1279 = dma.vmem_to_hbm [thread:$0]  %s1274, 256, %s4, [#allocation4], 128, 128, 8
    $region29: #{tpu_custom_call.1} parent=1 // pred_fallthru
      _
    // Predicated region
    $region30: #{tpu_custom_call.1} parent=1 // pred_check
      _
    $region31: #{tpu_custom_call.1} parent=1 // pred_check_branch
      %1281 = sbr.rel (0) target = $region33
    $region32: #{tpu_custom_call.1} parent=1 // pred_region
      %1282 = dma.done [#allocation4], 256
    $region33: #{tpu_custom_call.1} parent=1 // pred_fallthru
      _
    %1283 = vsyncpa [#allocation3], 1
    %1284 = vsyncpa [#allocation6], 1
    %1285 = vsyncpa [#allocation4], 1

</llo_original>
